<compile_context>
chip_gen: v6e
topology: v6e:2x2x1
jax: 0.10.0
libtpu: 0.0.40
codegen_flags: <defaults>
</compile_context>

<pallas_src>
import jax
import jax.numpy as jnp
from jax import lax
from jax.experimental import pallas as pl
from jax.experimental.pallas import tpu as pltpu


def _banded_conv_weight(w_oihw, scale, W):
    """Fold a BN scale into a 3x3 conv weight and lower it to 3 block-banded
    matmul operands (one per kernel row kh).

    Returns (3, (W+2)*Cin, W*Cout) bf16 with
        out[kh, (w+kw)*Cin + ci, w*Cout + co] = w_oihw[co, ci, kh, kw] * scale[co]
    so that   acc[h, w*Cout+co] += sum_i xpad[h+kh, i] * out[kh, i, w*Cout+co]
    realizes the kw / input-channel part of the 3x3 convolution directly in a
    lane-dense (H, W*Cout) output layout.
    """
    Cout, Cin = w_oihw.shape[0], w_oihw.shape[1]
    wk = jnp.transpose(w_oihw * scale[:, None, None, None], (2, 3, 1, 0))
    # wk: (3, 3, Cin, Cout), indexed [kh, kw, ci, co]
    mats = []
    for kh in range(3):
        m = jnp.zeros(((W + 2) * Cin, W * Cout), jnp.float32)
        for kw in range(3):
            # place[u, w] = 1  iff  u == w + kw
            place = jnp.eye(W + 2, W, k=-kw, dtype=jnp.float32)
            m = m + jnp.kron(place, wk[kh, kw])
        mats.append(m)
    return jnp.stack(mats).astype(jnp.bfloat16)


def _make_fused_block_kernel(H, W, Cin, C1, C2):
    """Fused BasicBlock kernel: one image per grid step, all lane-dense."""

    def kernel(x_ref, w1_ref, b1_ref, w2_ref, b2_ref, o_ref, xpad, midpad):
        x = x_ref[0]                                          # (H, W*Cin) f32

        # ---- stage input into the zero-haloed lane-dense scratch ----------
        # The zero side-columns (kw padding) ride inside the interior write;
        # the top/bottom halo rows (kh padding) are two tiny 1-row stores.
        zc_in = jnp.zeros((H, Cin), jnp.float32)
        xpad[pl.ds(1, H), :] = jnp.concatenate([zc_in, x, zc_in], axis=1)
        zr_in = jnp.zeros((1, (W + 2) * Cin), jnp.float32)
        xpad[pl.ds(0, 1), :] = zr_in
        xpad[pl.ds(H + 1, 1), :] = zr_in

        # ---- conv1 (3x3) + folded BN1 + ReLU ------------------------------
        # One MXU matmul per kernel row kh against the block-banded weight.
        acc1 = jnp.zeros((H, W * C1), jnp.float32)
        for kh in range(3):
            lhs = xpad[pl.ds(kh, H), :].astype(jnp.bfloat16)   # (H, (W+2)*Cin)
            acc1 = acc1 + jnp.dot(lhs, w1_ref[kh],
                                  preferred_element_type=jnp.float32)
        y1 = jnp.maximum(acc1 + b1_ref[...], 0.0)              # (H, W*C1)

        # ---- stage conv1 activation (never leaves VMEM) -------------------
        zc_mid = jnp.zeros((H, C1), jnp.float32)
        midpad[pl.ds(1, H), :] = jnp.concatenate([zc_mid, y1, zc_mid], axis=1)
        zr_mid = jnp.zeros((1, (W + 2) * C1), jnp.float32)
        midpad[pl.ds(0, 1), :] = zr_mid
        midpad[pl.ds(H + 1, 1), :] = zr_mid

        # ---- conv2 (3x3) + folded BN2 + residual + ReLU -------------------
        acc2 = jnp.zeros((H, W * C2), jnp.float32)
        for kh in range(3):
            lhs = midpad[pl.ds(kh, H), :].astype(jnp.bfloat16)  # (H, (W+2)*C1)
            acc2 = acc2 + jnp.dot(lhs, w2_ref[kh],
                                  preferred_element_type=jnp.float32)
        # Residual uses the f32 input block directly (C2 == Cin, so the lane
        # layouts w*C2+c and w*Cin+c coincide).  Single lane-dense store.
        o_ref[0] = jnp.maximum(acc2 + b2_ref[...] + x, 0.0).astype(o_ref.dtype)

    return kernel


def basic_block_forward(x_nchw, params, eps=1e-5):
    """Full BasicBlock forward (stride=1, downsample=None). NCHW in / out."""
    N, Cin, H, W = x_nchw.shape
    C1 = params["w1"].shape[0]          # conv1 weight: (C1, Cin, 3, 3)
    C2 = params["w2"].shape[0]          # conv2 weight: (C2, C1, 3, 3)
    assert params["w1"].shape[1] == Cin and params["w2"].shape[1] == C1
    assert C2 == Cin, "residual add requires out_c2 == in_c1 (stride=1, no downsample)"

    # Fold inference-mode BN: scale goes into the conv weights, bias stays.
    s1 = params["bn1_gamma"] / jnp.sqrt(params["bn1_var"] + eps)
    b1 = params["bn1_beta"] - params["bn1_mean"] * s1
    s2 = params["bn2_gamma"] / jnp.sqrt(params["bn2_var"] + eps)
    b2 = params["bn2_beta"] - params["bn2_mean"] * s2

    w1b = _banded_conv_weight(params["w1"], s1, W)     # (3, (W+2)*Cin, W*C1) bf16
    w2b = _banded_conv_weight(params["w2"], s2, W)     # (3, (W+2)*C1,  W*C2) bf16
    b1t = jnp.tile(b1, W).reshape(1, W * C1).astype(jnp.float32)
    b2t = jnp.tile(b2, W).reshape(1, W * C2).astype(jnp.float32)

    # Lane-dense NHWC input: (N, H, W*Cin) -> the HBM->VMEM DMA is 128-lane wide.
    x_flat = jnp.transpose(x_nchw, (0, 2, 3, 1)).reshape(N, H, W * Cin)
    x_flat = x_flat.astype(jnp.float32)

    kernel = _make_fused_block_kernel(H, W, Cin, C1, C2)

    out_flat = pl.pallas_call(
        kernel,
        out_shape=jax.ShapeDtypeStruct((N, H, W * C2), jnp.float32),
        grid_spec=pltpu.PrefetchScalarGridSpec(
            num_scalar_prefetch=0,
            grid=(N,),
            in_specs=[
                pl.BlockSpec((1, H, W * Cin), lambda n: (n, 0, 0)),
                pl.BlockSpec((3, (W + 2) * Cin, W * C1), lambda n: (0, 0, 0)),
                pl.BlockSpec((1, W * C1), lambda n: (0, 0)),
                pl.BlockSpec((3, (W + 2) * C1, W * C2), lambda n: (0, 0, 0)),
                pl.BlockSpec((1, W * C2), lambda n: (0, 0)),
            ],
            out_specs=pl.BlockSpec((1, H, W * C2), lambda n: (n, 0, 0)),
            scratch_shapes=[
                pltpu.VMEM((H + 2, (W + 2) * Cin), jnp.float32),  # haloed input
                pltpu.VMEM((H + 2, (W + 2) * C1), jnp.float32),   # haloed conv1 act
            ]),
        compiler_params=pltpu.CompilerParams(
            dimension_semantics=("parallel",)),
    )(x_flat, w1b, b1t, w2b, b2t)

    out = out_flat.reshape(N, H, W, C2)
    return jnp.transpose(out, (0, 3, 1, 2))  # -> NCHW


def _reference_forward(x, w1_oihw, w2_oihw, bn1, bn2, eps=1e-5):
    """Pure-JAX NCHW reference matching PyTorch semantics (eval-mode BN)."""
    def conv(a, w):
        return lax.conv_general_dilated(
            a, w, window_strides=(1, 1), padding=((1, 1), (1, 1)),
            dimension_numbers=("NCHW", "OIHW", "NCHW"))

    def bn(a, g, b, m, v):
        g, b, m, v = (t[None, :, None, None] for t in (g, b, m, v))
        return (a - m) / jnp.sqrt(v + eps) * g + b

    out = jax.nn.relu(bn(conv(x, w1_oihw), *bn1))
    out = bn(conv(out, w2_oihw), *bn2)
    return jax.nn.relu(out + x)


if __name__ == "__main__":
    # Small shapes consistent with the module: residual add requires
    # out_c2 == in_c1 (stride=1, downsample=None).
    in_c1, out_c1 = 8, 16      # c_in  = (in_c1, out_c1)
    in_c2, out_c2 = 16, 8      # c_out = (in_c2, out_c2)
    N, H, W = 2, 16, 16

    key = jax.random.PRNGKey(0)
    ks = jax.random.split(key, 11)

    # PyTorch Conv2d weight layout: (Cout, Cin, kh, kw), bias=False.
    w1_oihw = jax.random.normal(ks[0], (out_c1, in_c1, 3, 3), jnp.float32) * 0.1
    w2_oihw = jax.random.normal(ks[1], (out_c2, in_c2, 3, 3), jnp.float32) * 0.1

    bn1_gamma = 1.0 + 0.1 * jax.random.normal(ks[2], (out_c1,), jnp.float32)
    bn1_beta = 0.1 * jax.random.normal(ks[3], (out_c1,), jnp.float32)
    bn1_mean = 0.1 * jax.random.normal(ks[4], (out_c1,), jnp.float32)
    bn1_var = 1.0 + 0.1 * jnp.abs(jax.random.normal(ks[5], (out_c1,), jnp.float32))

    bn2_gamma = 1.0 + 0.1 * jax.random.normal(ks[6], (out_c2,), jnp.float32)
    bn2_beta = 0.1 * jax.random.normal(ks[7], (out_c2,), jnp.float32)
    bn2_mean = 0.1 * jax.random.normal(ks[8], (out_c2,), jnp.float32)
    bn2_var = 1.0 + 0.1 * jnp.abs(jax.random.normal(ks[9], (out_c2,), jnp.float32))

    params = {
        "w1": w1_oihw, "w2": w2_oihw,
        "bn1_gamma": bn1_gamma, "bn1_beta": bn1_beta,
        "bn1_mean": bn1_mean, "bn1_var": bn1_var,
        "bn2_gamma": bn2_gamma, "bn2_beta": bn2_beta,
        "bn2_mean": bn2_mean, "bn2_var": bn2_var,
    }

    x = jax.random.normal(ks[10], (N, in_c1, H, W), jnp.float32)  # NCHW

    out = jax.block_until_ready(basic_block_forward(x, params))

    ref = _reference_forward(
        x, w1_oihw, w2_oihw,
        (bn1_gamma, bn1_beta, bn1_mean, bn1_var),
        (bn2_gamma, bn2_beta, bn2_mean, bn2_var))

    assert out.shape == (N, out_c2, H, W)
    max_err = float(jnp.max(jnp.abs(out - ref)))
    # bf16 matmul operands (f32 accumulation) -> looser tolerance than f32.
    assert max_err < 5e-2, f"max abs err {max_err}"

    print("KERNEL_OK")
</pallas_src>

<mosaic_0001>
module attributes {stable_mosaic.version = 11 : i64} {
  func.func @kernel(%arg0: i32, %arg1: memref<1x16x128xf32, #tpu.memory_space<vmem>>, %arg2: memref<3x144x256xbf16, #tpu.memory_space<vmem>>, %arg3: memref<1x256xf32, #tpu.memory_space<vmem>>, %arg4: memref<3x288x128xbf16, #tpu.memory_space<vmem>>, %arg5: memref<1x128xf32, #tpu.memory_space<vmem>>, %arg6: memref<1x16x128xf32, #tpu.memory_space<vmem>>, %arg7: memref<18x144xf32, #tpu.memory_space<vmem>>, %arg8: memref<18x288xf32, #tpu.memory_space<vmem>>) attributes {dimension_semantics = [#tpu.dimension_semantics<parallel>], iteration_bounds = array<i64: 2>, scalar_prefetch = 0 : i64, scratch_operands = 2 : i64, tpu.core_type = #tpu.core_type<tc>, window_params = [{transform_indices = @transform_0, window_bounds = array<i64: 1, 16, 128>}, {pipeline_mode = #tpu.pipeline_mode<synchronous>, transform_indices = @transform_1, window_bounds = array<i64: 3, 144, 256>}, {pipeline_mode = #tpu.pipeline_mode<synchronous>, transform_indices = @transform_2, window_bounds = array<i64: 1, 256>}, {pipeline_mode = #tpu.pipeline_mode<synchronous>, transform_indices = @transform_3, window_bounds = array<i64: 3, 288, 128>}, {pipeline_mode = #tpu.pipeline_mode<synchronous>, transform_indices = @transform_4, window_bounds = array<i64: 1, 128>}, {transform_indices = @transform_5, window_bounds = array<i64: 1, 16, 128>}]} {
    %c0 = arith.constant 0 : index
    %c0_0 = arith.constant 0 : index
    %c0_1 = arith.constant 0 : index
    %0 = vector.load %arg1[%c0, %c0_0, %c0_1] : memref<1x16x128xf32, #tpu.memory_space<vmem>>, vector<1x16x128xf32>
    %1 = vector.shape_cast %0 : vector<1x16x128xf32> to vector<16x128xf32>
    %cst = arith.constant 0.000000e+00 : f32
    %2 = vector.broadcast %cst : f32 to vector<16x8xf32>
    %3 = tpu.concatenate %2, %1, %2 in 1 : vector<16x8xf32>, vector<16x128xf32>, vector<16x8xf32> -> vector<16x144xf32>
    %c1 = arith.constant 1 : index
    %c0_2 = arith.constant 0 : index
    %4 = vector.load %arg7[%c1, %c0_2] : memref<18x144xf32, #tpu.memory_space<vmem>>, vector<16x144xf32>
    tpu.vector_store %arg7[%c1, %c0_2], %3 {strides = array<i32>} : memref<18x144xf32, #tpu.memory_space<vmem>>, vector<16x144xf32>,
    %cst_3 = arith.constant 0.000000e+00 : f32
    %5 = vector.broadcast %cst_3 : f32 to vector<1x144xf32>
    %c0_4 = arith.constant 0 : index
    %c0_5 = arith.constant 0 : index
    %6 = vector.load %arg7[%c0_4, %c0_5] : memref<18x144xf32, #tpu.memory_space<vmem>>, vector<1x144xf32>
    tpu.vector_store %arg7[%c0_4, %c0_5], %5 {strides = array<i32>} : memref<18x144xf32, #tpu.memory_space<vmem>>, vector<1x144xf32>,
    %c17 = arith.constant 17 : index
    %c0_6 = arith.constant 0 : index
    %7 = vector.load %arg7[%c17, %c0_6] : memref<18x144xf32, #tpu.memory_space<vmem>>, vector<1x144xf32>
    tpu.vector_store %arg7[%c17, %c0_6], %5 {strides = array<i32>} : memref<18x144xf32, #tpu.memory_space<vmem>>, vector<1x144xf32>,
    %cst_7 = arith.constant 0.000000e+00 : f32
    %8 = vector.broadcast %cst_7 : f32 to vector<16x256xf32>
    %c0_8 = arith.constant 0 : index
    %c0_9 = arith.constant 0 : index
    %9 = vector.load %arg7[%c0_8, %c0_9] : memref<18x144xf32, #tpu.memory_space<vmem>>, vector<16x144xf32>
    %10 = arith.truncf %9 : vector<16x144xf32> to vector<16x144xbf16>
    %c0_10 = arith.constant 0 : index
    %c0_11 = arith.constant 0 : index
    %c0_12 = arith.constant 0 : index
    %11 = vector.load %arg2[%c0_10, %c0_11, %c0_12] : memref<3x144x256xbf16, #tpu.memory_space<vmem>>, vector<1x144x256xbf16>
    %12 = vector.shape_cast %11 : vector<1x144x256xbf16> to vector<144x256xbf16>
    %cst_13 = arith.constant dense<0.000000e+00> : vector<16x256xf32>
    %13 = tpu.matmul %10, %12, %cst_13 {dimension_numbers = #tpu.dot_dimension_numbers<[1], [0], [0], [1], [0, 0, 1, 1], [], []>} : vector<16x144xbf16>, vector<144x256xbf16>, vector<16x256xf32> -> vector<16x256xf32>
    %14 = arith.addf %8, %13 : vector<16x256xf32>
    %c1_14 = arith.constant 1 : index
    %c0_15 = arith.constant 0 : index
    %15 = vector.load %arg7[%c1_14, %c0_15] : memref<18x144xf32, #tpu.memory_space<vmem>>, vector<16x144xf32>
    %16 = arith.truncf %15 : vector<16x144xf32> to vector<16x144xbf16>
    %c1_16 = arith.constant 1 : index
    %c0_17 = arith.constant 0 : index
    %c0_18 = arith.constant 0 : index
    %17 = vector.load %arg2[%c1_16, %c0_17, %c0_18] : memref<3x144x256xbf16, #tpu.memory_space<vmem>>, vector<1x144x256xbf16>
    %18 = vector.shape_cast %17 : vector<1x144x256xbf16> to vector<144x256xbf16>
    %cst_19 = arith.constant dense<0.000000e+00> : vector<16x256xf32>
    %19 = tpu.matmul %16, %18, %cst_19 {dimension_numbers = #tpu.dot_dimension_numbers<[1], [0], [0], [1], [0, 0, 1, 1], [], []>} : vector<16x144xbf16>, vector<144x256xbf16>, vector<16x256xf32> -> vector<16x256xf32>
    %20 = arith.addf %14, %19 : vector<16x256xf32>
    %c2 = arith.constant 2 : index
    %c0_20 = arith.constant 0 : index
    %21 = vector.load %arg7[%c2, %c0_20] : memref<18x144xf32, #tpu.memory_space<vmem>>, vector<16x144xf32>
    %22 = arith.truncf %21 : vector<16x144xf32> to vector<16x144xbf16>
    %c2_21 = arith.constant 2 : index
    %c0_22 = arith.constant 0 : index
    %c0_23 = arith.constant 0 : index
    %23 = vector.load %arg2[%c2_21, %c0_22, %c0_23] : memref<3x144x256xbf16, #tpu.memory_space<vmem>>, vector<1x144x256xbf16>
    %24 = vector.shape_cast %23 : vector<1x144x256xbf16> to vector<144x256xbf16>
    %cst_24 = arith.constant dense<0.000000e+00> : vector<16x256xf32>
    %25 = tpu.matmul %22, %24, %cst_24 {dimension_numbers = #tpu.dot_dimension_numbers<[1], [0], [0], [1], [0, 0, 1, 1], [], []>} : vector<16x144xbf16>, vector<144x256xbf16>, vector<16x256xf32> -> vector<16x256xf32>
    %26 = arith.addf %20, %25 : vector<16x256xf32>
    %c0_25 = arith.constant 0 : index
    %c0_26 = arith.constant 0 : index
    %27 = vector.load %arg3[%c0_25, %c0_26] : memref<1x256xf32, #tpu.memory_space<vmem>>, vector<1x256xf32>
    %28 = vector.broadcast %27 : vector<1x256xf32> to vector<16x256xf32>
    %29 = arith.addf %26, %28 : vector<16x256xf32>
    %cst_27 = arith.constant 0.000000e+00 : f32
    %30 = vector.broadcast %cst_27 : f32 to vector<16x256xf32>
    %31 = arith.maximumf %29, %30 : vector<16x256xf32>
    %cst_28 = arith.constant 0.000000e+00 : f32
    %32 = vector.broadcast %cst_28 : f32 to vector<16x16xf32>
    %33 = tpu.concatenate %32, %31, %32 in 1 : vector<16x16xf32>, vector<16x256xf32>, vector<16x16xf32> -> vector<16x288xf32>
    %c1_29 = arith.constant 1 : index
    %c0_30 = arith.constant 0 : index
    %34 = vector.load %arg8[%c1_29, %c0_30] : memref<18x288xf32, #tpu.memory_space<vmem>>, vector<16x288xf32>
    tpu.vector_store %arg8[%c1_29, %c0_30], %33 {strides = array<i32>} : memref<18x288xf32, #tpu.memory_space<vmem>>, vector<16x288xf32>,
    %cst_31 = arith.constant 0.000000e+00 : f32
    %35 = vector.broadcast %cst_31 : f32 to vector<1x288xf32>
    %c0_32 = arith.constant 0 : index
    %c0_33 = arith.constant 0 : index
    %36 = vector.load %arg8[%c0_32, %c0_33] : memref<18x288xf32, #tpu.memory_space<vmem>>, vector<1x288xf32>
    tpu.vector_store %arg8[%c0_32, %c0_33], %35 {strides = array<i32>} : memref<18x288xf32, #tpu.memory_space<vmem>>, vector<1x288xf32>,
    %c17_34 = arith.constant 17 : index
    %c0_35 = arith.constant 0 : index
    %37 = vector.load %arg8[%c17_34, %c0_35] : memref<18x288xf32, #tpu.memory_space<vmem>>, vector<1x288xf32>
    tpu.vector_store %arg8[%c17_34, %c0_35], %35 {strides = array<i32>} : memref<18x288xf32, #tpu.memory_space<vmem>>, vector<1x288xf32>,
    %cst_36 = arith.constant 0.000000e+00 : f32
    %38 = vector.broadcast %cst_36 : f32 to vector<16x128xf32>
    %c0_37 = arith.constant 0 : index
    %c0_38 = arith.constant 0 : index
    %39 = vector.load %arg8[%c0_37, %c0_38] : memref<18x288xf32, #tpu.memory_space<vmem>>, vector<16x288xf32>
    %40 = arith.truncf %39 : vector<16x288xf32> to vector<16x288xbf16>
    %c0_39 = arith.constant 0 : index
    %c0_40 = arith.constant 0 : index
    %c0_41 = arith.constant 0 : index
    %41 = vector.load %arg4[%c0_39, %c0_40, %c0_41] : memref<3x288x128xbf16, #tpu.memory_space<vmem>>, vector<1x288x128xbf16>
    %42 = vector.shape_cast %41 : vector<1x288x128xbf16> to vector<288x128xbf16>
    %cst_42 = arith.constant dense<0.000000e+00> : vector<16x128xf32>
    %43 = tpu.matmul %40, %42, %cst_42 {dimension_numbers = #tpu.dot_dimension_numbers<[1], [0], [0], [1], [0, 0, 1, 1], [], []>} : vector<16x288xbf16>, vector<288x128xbf16>, vector<16x128xf32> -> vector<16x128xf32>
    %44 = arith.addf %38, %43 : vector<16x128xf32>
    %c1_43 = arith.constant 1 : index
    %c0_44 = arith.constant 0 : index
    %45 = vector.load %arg8[%c1_43, %c0_44] : memref<18x288xf32, #tpu.memory_space<vmem>>, vector<16x288xf32>
    %46 = arith.truncf %45 : vector<16x288xf32> to vector<16x288xbf16>
    %c1_45 = arith.constant 1 : index
    %c0_46 = arith.constant 0 : index
    %c0_47 = arith.constant 0 : index
    %47 = vector.load %arg4[%c1_45, %c0_46, %c0_47] : memref<3x288x128xbf16, #tpu.memory_space<vmem>>, vector<1x288x128xbf16>
    %48 = vector.shape_cast %47 : vector<1x288x128xbf16> to vector<288x128xbf16>
    %cst_48 = arith.constant dense<0.000000e+00> : vector<16x128xf32>
    %49 = tpu.matmul %46, %48, %cst_48 {dimension_numbers = #tpu.dot_dimension_numbers<[1], [0], [0], [1], [0, 0, 1, 1], [], []>} : vector<16x288xbf16>, vector<288x128xbf16>, vector<16x128xf32> -> vector<16x128xf32>
    %50 = arith.addf %44, %49 : vector<16x128xf32>
    %c2_49 = arith.constant 2 : index
    %c0_50 = arith.constant 0 : index
    %51 = vector.load %arg8[%c2_49, %c0_50] : memref<18x288xf32, #tpu.memory_space<vmem>>, vector<16x288xf32>
    %52 = arith.truncf %51 : vector<16x288xf32> to vector<16x288xbf16>
    %c2_51 = arith.constant 2 : index
    %c0_52 = arith.constant 0 : index
    %c0_53 = arith.constant 0 : index
    %53 = vector.load %arg4[%c2_51, %c0_52, %c0_53] : memref<3x288x128xbf16, #tpu.memory_space<vmem>>, vector<1x288x128xbf16>
    %54 = vector.shape_cast %53 : vector<1x288x128xbf16> to vector<288x128xbf16>
    %cst_54 = arith.constant dense<0.000000e+00> : vector<16x128xf32>
    %55 = tpu.matmul %52, %54, %cst_54 {dimension_numbers = #tpu.dot_dimension_numbers<[1], [0], [0], [1], [0, 0, 1, 1], [], []>} : vector<16x288xbf16>, vector<288x128xbf16>, vector<16x128xf32> -> vector<16x128xf32>
    %56 = arith.addf %50, %55 : vector<16x128xf32>
    %c0_55 = arith.constant 0 : index
    %c0_56 = arith.constant 0 : index
    %57 = vector.load %arg5[%c0_55, %c0_56] : memref<1x128xf32, #tpu.memory_space<vmem>>, vector<1x128xf32>
    %58 = vector.broadcast %57 : vector<1x128xf32> to vector<16x128xf32>
    %59 = arith.addf %56, %58 : vector<16x128xf32>
    %60 = arith.addf %59, %1 : vector<16x128xf32>
    %cst_57 = arith.constant 0.000000e+00 : f32
    %61 = vector.broadcast %cst_57 : f32 to vector<16x128xf32>
    %62 = arith.maximumf %60, %61 : vector<16x128xf32>
    %c0_58 = arith.constant 0 : index
    %c0_59 = arith.constant 0 : index
    %c0_60 = arith.constant 0 : index
    %63 = vector.load %arg6[%c0_58, %c0_59, %c0_60] : memref<1x16x128xf32, #tpu.memory_space<vmem>>, vector<1x16x128xf32>
    %64 = vector.shape_cast %63 : vector<1x16x128xf32> to vector<16x128xf32>
    %65 = vector.shape_cast %62 : vector<16x128xf32> to vector<1x16x128xf32>
    tpu.vector_store %arg6[%c0_58, %c0_59, %c0_60], %65 {strides = array<i32>} : memref<1x16x128xf32, #tpu.memory_space<vmem>>, vector<1x16x128xf32>,
    return
  }
  func.func @transform_0(%arg0: i32) -> (i32, i32, i32) {
    %c0_i32 = arith.constant 0 : i32
    %c0_i32_0 = arith.constant 0 : i32
    %c0_i32_1 = arith.constant 0 : i32
    return %arg0, %c0_i32, %c0_i32_0 : i32, i32, i32
  }
  func.func @transform_1(%arg0: i32) -> (i32, i32, i32) {
    %c0_i32 = arith.constant 0 : i32
    %c0_i32_0 = arith.constant 0 : i32
    %c0_i32_1 = arith.constant 0 : i32
    %c0_i32_2 = arith.constant 0 : i32
    return %c0_i32, %c0_i32_0, %c0_i32_1 : i32, i32, i32
  }
  func.func @transform_2(%arg0: i32) -> (i32, i32) {
    %c0_i32 = arith.constant 0 : i32
    %c0_i32_0 = arith.constant 0 : i32
    %c0_i32_1 = arith.constant 0 : i32
    return %c0_i32, %c0_i32_0 : i32, i32
  }
  func.func @transform_3(%arg0: i32) -> (i32, i32, i32) {
    %c0_i32 = arith.constant 0 : i32
    %c0_i32_0 = arith.constant 0 : i32
    %c0_i32_1 = arith.constant 0 : i32
    %c0_i32_2 = arith.constant 0 : i32
    return %c0_i32, %c0_i32_0, %c0_i32_1 : i32, i32, i32
  }
  func.func @transform_4(%arg0: i32) -> (i32, i32) {
    %c0_i32 = arith.constant 0 : i32
    %c0_i32_0 = arith.constant 0 : i32
    %c0_i32_1 = arith.constant 0 : i32
    return %c0_i32, %c0_i32_0 : i32, i32
  }
  func.func @transform_5(%arg0: i32) -> (i32, i32, i32) {
    %c0_i32 = arith.constant 0 : i32
    %c0_i32_0 = arith.constant 0 : i32
    %c0_i32_1 = arith.constant 0 : i32
    return %arg0, %c0_i32, %c0_i32_0 : i32, i32, i32
  }
}

</mosaic_0001>

<llo_original>
// kernel: tpu_custom_call.1
$region0: #{tpu_custom_call.1}
  #allocation0 [shape = 'u32[]', space=smem, size = 0x4, offset = 0x4, fixed_abs, tag = 'smem constant byte address 0x4 - core index']
  #allocation1 [shape = 'u32[144,128]{1,0:T(1,128)}', space=vmem, size = 0x12000, scoped, tag = 'internal scratch']
  #allocation2 [shape = 'f32[18,144]{1,0:T(8,128)}', space=vmem, size = 0x6000, scoped, tag = 'scratch operand']
  #allocation3 [shape = 'f32[18,288]{1,0:T(8,128)}', space=vmem, size = 0x9000, scoped, tag = 'scratch operand']
  %s0 = inlined_call_operand.hbm [shape: f32[2,16,128], index: 0, kind: input, shape index: {}]
  %s1 = inlined_call_operand.hbm [shape: bf16[3,144,256], index: 1, kind: input, shape index: {}]
  %s2 = inlined_call_operand.vmem [shape: f32[1,256], index: 2, kind: input, shape index: {}]
  %s3 = inlined_call_operand.hbm [shape: bf16[3,288,128], index: 3, kind: input, shape index: {}]
  %s4 = inlined_call_operand.vmem [shape: f32[1,128], index: 4, kind: input, shape index: {}]
  %s5 = inlined_call_operand.hbm [shape: f32[2,16,128], index: 5, kind: output, shape index: {}]
  %s6 = sld [smem:[#allocation0]]
  $region65: #{tpu_custom_call.1} parent=0
    _
  %s8 = ssub.s32 1, %s6
  %s9 = scalar_select 0, %s8, %s6
  $region1: #{tpu_custom_call.1} parent=0
    #allocation4 [shape = 'u8[16384]{0}', space=vmem, size = 0x4000, scoped, tag = 'input window, operand 0']
    #allocation5 [shape = 's32[2]{0}', space=sflag, size = 0x8, scoped, tag = 'scoped memory for tpu_custom_call.1']
    #allocation6 [shape = 's32[2]{0}', space=sflag, size = 0x8, scoped, tag = 'scoped memory for tpu_custom_call.1']
    #allocation7 [shape = 'u8[221184]{0}', space=vmem, size = 0x36000, scoped, tag = 'input window, operand 1, single buffered']
    #allocation8 [shape = 's32[1]{0}', space=sflag, size = 0x4, scoped, tag = 'scoped memory for tpu_custom_call.1']
    #allocation9 [shape = 'u8[221184]{0}', space=vmem, size = 0x36000, scoped, tag = 'input window, operand 3, single buffered']
    #allocation10 [shape = 'u8[16384]{0}', space=vmem, size = 0x4000, scoped, tag = 'output window, operand 0']
    %10 = vsyncpa [#allocation5], 0
    %s11 = scalar_lea.sflag [#allocation5], 1
    %12 = vsyncpa %s11, 0
    %13 = vsyncpa [#allocation8], 0
    %14 = vsyncpa [#allocation6], 0
    %s15 = scalar_lea.sflag [#allocation6], 1
    %16 = vsyncpa %s15, 0
    loop: start=0, step=1, limit=4
    $region2: #{tpu_custom_call.1} parent=1 // loop_pre_header
      _
    $region3: #{tpu_custom_call.1} parent=1 // loop_header
      %s18 = sphi 0, %s22
      %p19 = scmp.ge.s32.totalorder %s18, 4
      %s28 = sphi 0, %s30
      %s31 = sphi 0, %s28
      %s32 = sphi 0, %s31
      %s48 = sphi 0, %s32
      %s52 = sphi 0, %s52
      %s54 = sphi 0, %s52
      %s55 = sphi 0, %s54
      %s69 = sphi 0, %s55
      %s73 = sphi 0, %s73
      %s75 = sphi 0, %s73
      %s76 = sphi 0, %s75
      %s90 = sphi 0, %s76
      %s94 = sphi 0, %s94
      %s96 = sphi 0, %s94
      %s97 = sphi 0, %s96
      %s111 = sphi 0, %s97
      %s115 = sphi 0, %s115
      %s117 = sphi 0, %s115
      %s118 = sphi 0, %s117
      %s132 = sphi 0, %s118
      %s138 = sphi 0, %s140
      %s141 = sphi 0, %s138
      %s142 = sphi 0, %s141
      %s158 = sphi 0, %s142
    $region4: #{tpu_custom_call.1} parent=1 // loop_header_branch
      %21 = sbr.rel (%p19) target = $region8
    $region5: #{tpu_custom_call.1} parent=1 // loop_body
      %s23 = ssub.s32 %s18, 1
      %s24 = ssub.s32 %s18, 2
      %s25 = sadd.s32 %s18, 1
      %s26 = ssub.s32 %s18, %s25
      %p27 = scmp.eq.s32.totalorder %s26, 0
      %s29 = sadd.s32 %s28, 1
      %s30 = scalar_select %p27, %s28, %s29
      %p33 = pneg %p27
      %p34 = scmp.eq.s32.totalorder %s18, 1
      %p35 = por %p33, %p34
      %p36 = scmp.ne.s32.totalorder %s28, %s31
      %p37 = scmp.eq.s32.totalorder %s18, 0
      %p38 = por %p36, %p37
      %p39 = scmp.ne.s32.totalorder %s28, %s31
      %p40 = scmp.eq.s32.totalorder %s23, 1
      %p41 = por %p39, %p40
      %p42 = scmp.ne.s32.totalorder %s31, %s32
      %p43 = scmp.eq.s32.totalorder %s23, 0
      %p44 = por %p42, %p43
      %p45 = scmp.ne.s32.totalorder %s31, %s32
      %p46 = scmp.eq.s32.totalorder %s24, 1
      %p47 = por %p45, %p46
      %p49 = scmp.ne.s32.totalorder %s32, %s48
      %p50 = scmp.eq.s32.totalorder %s24, 0
      %p51 = por %p49, %p50
      %s53 = sadd.s32 %s52, 1
      %p56 = scmp.eq.s32.totalorder %s18, 1
      %p57 = scmp.ne.s32.totalorder %s52, %s54
      %p58 = scmp.eq.s32.totalorder %s18, 0
      %p59 = por %p57, %p58
      %p60 = scmp.ne.s32.totalorder %s52, %s54
      %p61 = scmp.eq.s32.totalorder %s23, 1
      %p62 = por %p60, %p61
      %p63 = scmp.ne.s32.totalorder %s54, %s55
      %p64 = scmp.eq.s32.totalorder %s23, 0
      %p65 = por %p63, %p64
      %p66 = scmp.ne.s32.totalorder %s54, %s55
      %p67 = scmp.eq.s32.totalorder %s24, 1
      %p68 = por %p66, %p67
      %p70 = scmp.ne.s32.totalorder %s55, %s69
      %p71 = scmp.eq.s32.totalorder %s24, 0
      %p72 = por %p70, %p71
      %s74 = sadd.s32 %s73, 1
      %p77 = scmp.eq.s32.totalorder %s18, 1
      %p78 = scmp.ne.s32.totalorder %s73, %s75
      %p79 = scmp.eq.s32.totalorder %s18, 0
      %p80 = por %p78, %p79
      %p81 = scmp.ne.s32.totalorder %s73, %s75
      %p82 = scmp.eq.s32.totalorder %s23, 1
      %p83 = por %p81, %p82
      %p84 = scmp.ne.s32.totalorder %s75, %s76
      %p85 = scmp.eq.s32.totalorder %s23, 0
      %p86 = por %p84, %p85
      %p87 = scmp.ne.s32.totalorder %s75, %s76
      %p88 = scmp.eq.s32.totalorder %s24, 1
      %p89 = por %p87, %p88
      %p91 = scmp.ne.s32.totalorder %s76, %s90
      %p92 = scmp.eq.s32.totalorder %s24, 0
      %p93 = por %p91, %p92
      %s95 = sadd.s32 %s94, 1
      %p98 = scmp.eq.s32.totalorder %s18, 1
      %p99 = scmp.ne.s32.totalorder %s94, %s96
      %p100 = scmp.eq.s32.totalorder %s18, 0
      %p101 = por %p99, %p100
      %p102 = scmp.ne.s32.totalorder %s94, %s96
      %p103 = scmp.eq.s32.totalorder %s23, 1
      %p104 = por %p102, %p103
      %p105 = scmp.ne.s32.totalorder %s96, %s97
      %p106 = scmp.eq.s32.totalorder %s23, 0
      %p107 = por %p105, %p106
      %p108 = scmp.ne.s32.totalorder %s96, %s97
      %p109 = scmp.eq.s32.totalorder %s24, 1
      %p110 = por %p108, %p109
      %p112 = scmp.ne.s32.totalorder %s97, %s111
      %p113 = scmp.eq.s32.totalorder %s24, 0
      %p114 = por %p112, %p113
      %s116 = sadd.s32 %s115, 1
      %p119 = scmp.eq.s32.totalorder %s18, 1
      %p120 = scmp.ne.s32.totalorder %s115, %s117
      %p121 = scmp.eq.s32.totalorder %s18, 0
      %p122 = por %p120, %p121
      %p123 = scmp.ne.s32.totalorder %s115, %s117
      %p124 = scmp.eq.s32.totalorder %s23, 1
      %p125 = por %p123, %p124
      %p126 = scmp.ne.s32.totalorder %s117, %s118
      %p127 = scmp.eq.s32.totalorder %s23, 0
      %p128 = por %p126, %p127
      %p129 = scmp.ne.s32.totalorder %s117, %s118
      %p130 = scmp.eq.s32.totalorder %s24, 1
      %p131 = por %p129, %p130
      %p133 = scmp.ne.s32.totalorder %s118, %s132
      %p134 = scmp.eq.s32.totalorder %s24, 0
      %p135 = por %p133, %p134
      %s136 = ssub.s32 %s18, %s25
      %p137 = scmp.eq.s32.totalorder %s136, 0
      %s139 = sadd.s32 %s138, 1
      %s140 = scalar_select %p137, %s138, %s139
      %p143 = pneg %p137
      %p144 = scmp.eq.s32.totalorder %s18, 1
      %p145 = por %p143, %p144
      %p146 = scmp.ne.s32.totalorder %s138, %s141
      %p147 = scmp.eq.s32.totalorder %s18, 0
      %p148 = por %p146, %p147
      %p149 = scmp.ne.s32.totalorder %s138, %s141
      %p150 = scmp.eq.s32.totalorder %s23, 1
      %p151 = por %p149, %p150
      %p152 = scmp.ne.s32.totalorder %s141, %s142
      %p153 = scmp.eq.s32.totalorder %s23, 0
      %p154 = por %p152, %p153
      %p155 = scmp.ne.s32.totalorder %s141, %s142
      %p156 = scmp.eq.s32.totalorder %s24, 1
      %p157 = por %p155, %p156
      %p159 = scmp.ne.s32.totalorder %s142, %s158
      %p160 = scmp.eq.s32.totalorder %s24, 0
      %p161 = por %p159, %p160
      %p162 = scmp.le.s32.totalorder 1, %s18
      %p163 = scmp.lt.s32.totalorder %s18, 3
      %p164 = pnand %p162, %p163
      %p165 = pneg %p164
      // Predicated region
      $region9: #{tpu_custom_call.1} parent=5 // pred_check
        _
      $region10: #{tpu_custom_call.1} parent=5 // pred_check_branch
        %167 = sbr.rel (%p164) target = $region12
      $region11: #{tpu_custom_call.1} parent=5 // pred_region
        %s168 = ssub.s32 %s18, 1
        // Predicated region
        $region13: #{tpu_custom_call.1} parent=11 // pred_check
          %p169 = pneg %p65
        $region14: #{tpu_custom_call.1} parent=11 // pred_check_branch
          %171 = sbr.rel (%p169) target = $region16
        $region15: #{tpu_custom_call.1} parent=11 // pred_region
          %s173 = ssub.s32 6912, 6912
          %174 = vsyncadd [#allocation8], %s173
          %s175 = sshll.u32 [#allocation7], 4
          %s176 = int_to_ptr.vmem [resolvable:$true] %s175
          %181 = dma.hbm_to_vmem [thread:$0]  %s1, 6912, %s176, [#allocation8], 128, 128, 8
        $region16: #{tpu_custom_call.1} parent=11 // pred_fallthru
          _
        // Predicated region
        $region17: #{tpu_custom_call.1} parent=11 // pred_check
          %p182 = pneg %p86
        $region18: #{tpu_custom_call.1} parent=11 // pred_check_branch
          %184 = sbr.rel (%p182) target = $region20
        $region19: #{tpu_custom_call.1} parent=11 // pred_region
          _
        $region20: #{tpu_custom_call.1} parent=11 // pred_fallthru
          _
        // Predicated region
        $region21: #{tpu_custom_call.1} parent=11 // pred_check
          %p185 = pneg %p107
        $region22: #{tpu_custom_call.1} parent=11 // pred_check_branch
          %187 = sbr.rel (%p185) target = $region24
        $region23: #{tpu_custom_call.1} parent=11 // pred_region
          %s189 = ssub.s32 6912, 6912
          %190 = vsyncadd [#allocation8], %s189
          %s191 = sshll.u32 [#allocation9], 4
          %s192 = int_to_ptr.vmem [resolvable:$true] %s191
          %197 = dma.hbm_to_vmem [thread:$0]  %s3, 6912, %s192, [#allocation8], 64, 64, 4
        $region24: #{tpu_custom_call.1} parent=11 // pred_fallthru
          _
        // Predicated region
        $region25: #{tpu_custom_call.1} parent=11 // pred_check
          %p198 = pneg %p128
        $region26: #{tpu_custom_call.1} parent=11 // pred_check_branch
          %200 = sbr.rel (%p198) target = $region28
        $region27: #{tpu_custom_call.1} parent=11 // pred_region
          _
        $region28: #{tpu_custom_call.1} parent=11 // pred_fallthru
          _
      $region12: #{tpu_custom_call.1} parent=5 // pred_fallthru
        _
      %p201 = scmp.lt.s32.totalorder %s18, 2
      // Predicated region
      $region29: #{tpu_custom_call.1} parent=5 // pred_check
        %p202 = pneg %p201
      $region30: #{tpu_custom_call.1} parent=5 // pred_check_branch
        %204 = sbr.rel (%p202) target = $region32
      $region31: #{tpu_custom_call.1} parent=5 // pred_region
        // Predicated region
        $region33: #{tpu_custom_call.1} parent=31 // pred_check
          %p205 = pneg %p38
        $region34: #{tpu_custom_call.1} parent=31 // pred_check_branch
          %207 = sbr.rel (%p205) target = $region36
        $region35: #{tpu_custom_call.1} parent=31 // pred_region
          %s208 = sand.u32 %s28, 1
          %s209 = scalar_lea.sflag [#allocation5], %s208
          %s210 = sand.u32 %s28, 1
          %s211 = smul.addr %s210, 16
          %s212 = scalar_lea.vmem [#allocation4], %s211
          %s214 = ssub.s32 256, 256
          %215 = vsyncadd %s209, %s214
          %s216 = smul.addr %s18, 2
          %s217 = smul.addr %s216, 128
          %s218 = scalar_lea.hbm %s0, %s217
          %s219 = sshll.u32 %s212, 4
          %s220 = int_to_ptr.vmem [resolvable:$true] %s219
          %225 = dma.hbm_to_vmem [thread:$0]  %s218, 256, %s220, %s209, 128, 128, 8
        $region36: #{tpu_custom_call.1} parent=31 // pred_fallthru
          _
      $region32: #{tpu_custom_call.1} parent=5 // pred_fallthru
        _
      %p226 = scmp.le.s32.totalorder 1, %s18
      %p227 = scmp.lt.s32.totalorder %s18, 3
      %p228 = pnand %p226, %p227
      %p229 = pneg %p228
      // Predicated region
      $region37: #{tpu_custom_call.1} parent=5 // pred_check
        _
      $region38: #{tpu_custom_call.1} parent=5 // pred_check_branch
        %231 = sbr.rel (%p228) target = $region40
      $region39: #{tpu_custom_call.1} parent=5 // pred_region
        %s232 = ssub.s32 %s18, 1
        %s233 = sand.u32 %s31, 1
        %s234 = scalar_lea.sflag [#allocation5], %s233
        %s235 = sand.u32 %s31, 1
        %s236 = smul.addr %s235, 16
        %s237 = scalar_lea.vmem [#allocation4], %s236
        // Predicated region
        $region41: #{tpu_custom_call.1} parent=39 // pred_check
          %p238 = pneg %p44
        $region42: #{tpu_custom_call.1} parent=39 // pred_check_branch
          %240 = sbr.rel (%p238) target = $region44
        $region43: #{tpu_custom_call.1} parent=39 // pred_region
          %241 = dma.done %s234, 256
        $region44: #{tpu_custom_call.1} parent=39 // pred_fallthru
          _
        // Predicated region
        $region45: #{tpu_custom_call.1} parent=39 // pred_check
          %p242 = pneg %p65
        $region46: #{tpu_custom_call.1} parent=39 // pred_check_branch
          %244 = sbr.rel (%p242) target = $region48
        $region47: #{tpu_custom_call.1} parent=39 // pred_region
          %245 = dma.done [#allocation8], 6912
        $region48: #{tpu_custom_call.1} parent=39 // pred_fallthru
          _
        // Predicated region
        $region49: #{tpu_custom_call.1} parent=39 // pred_check
          %p246 = pneg %p107
        $region50: #{tpu_custom_call.1} parent=39 // pred_check_branch
          %248 = sbr.rel (%p246) target = $region52
        $region51: #{tpu_custom_call.1} parent=39 // pred_region
          %249 = dma.done [#allocation8], 6912
        $region52: #{tpu_custom_call.1} parent=39 // pred_fallthru
          _
        %s250 = sand.u32 %s31, 1
        %s251 = scalar_lea.sflag [#allocation5], %s250
        %s252 = sand.u32 %s31, 1
        %s253 = smul.addr %s252, 16
        %s254 = scalar_lea.vmem [#allocation4], %s253
        %p255 = pneg %p44
        %p256 = pneg %p41
        %p257 = pneg %p65
        %p258 = pneg %p62
        %p259 = pneg %p86
        %p260 = pneg %p83
        %p261 = pneg %p107
        %p262 = pneg %p104
        %p263 = pneg %p128
        %p264 = pneg %p125
        %p265 = pneg %p154
        %p266 = pneg %p151
        %s267 = sand.u32 %s141, 1
        %s268 = scalar_lea.sflag [#allocation6], %s267
        %s269 = sand.u32 %s141, 1
        %s270 = smul.addr %s269, 16
        %s271 = scalar_lea.vmem [#allocation10], %s270
        %v273 = vld [vmem:[%s237] sm:$0xff]
        %v274 = vld [vmem:[%s237 + $0x8] sm:$0xff]
        %277 = vrot.lane.b32.xlu0 %v273, 8
        %v278 = vpop.permute.xlu0 %277
        %279 = vrot.lane.b32.xlu0 %v274, 8
        %v280 = vpop.permute.xlu0 %279
        %vm283 = vcmask 64512
        %v284 = vsel %vm283, 0.0, %v278
        %v285 = vsel %vm283, 0.0, %v280
        %v286 = vsel %vm283, %v278, 0.0
        %v287 = vsel %vm283, %v280, 0.0
        %vm292 = vcmask 1040384
        %v293 = vrot.slane %v284, 7
        %v294 = vrot.slane %v286, 7
        %v295 = vrot.slane %v285, 7
        %v296 = vsel %vm292, %v293, %v295
        %v297 = vrot.slane %v287, 7
        %v298 = vsel %vm292, %v294, %v297
        %305 = vst [vmem:[#allocation2] sm:$0xfe] %v293
        %vm306 = vcmask 130049
        %307 = vst.msk [vmem:[#allocation2 + $0x8] sm:$0xfe] %vm306, %v294
        %308 = vst [vmem:[#allocation2 + $0x10] sm:$0xff] %v296
        %vm309 = vcmask 130048
        %310 = vst.msk [vmem:[#allocation2 + $0x18] sm:$0xff] %vm309, %v298
        %311 = vst [vmem:[#allocation2 + $0x20] sm:$0x1] %v295
        %vm312 = vcmask 122880
        %313 = vst.msk [vmem:[#allocation2 + $0x28] sm:$0x1] %vm312, %v297
        %v314 = vlaneseq
        %vm315 = vcmp.ge.s32.totalorder %v314, 0
        %vm316 = vcmp.lt.s32.totalorder %v314, 144
        %vm317 = vmand %vm315, %vm316
        %318 = vst.msk [vmem:[#allocation2] ss:$8 sm:$0x3] %vm317, 0.0
        %319 = vst.msk [vmem:[#allocation2] ss:$8 sm:$0x0] %vm317, 0.0
        %s320 = scalar_lea.vmem [#allocation2], 33
        %321 = vst.msk [vmem:[%s320] ss:$8 sm:$0x3] %vm317, 0.0
        %322 = vst.msk [vmem:[%s320] ss:$8 sm:$0x0] %vm317, 0.0
        %v323 = vld [vmem:[#allocation2] sm:$0xff]
        %v324 = vld [vmem:[#allocation2 + $0x8] sm:$0xff]
        %v325 = vld [vmem:[#allocation2 + $0x10] sm:$0xff]
        %v326 = vld [vmem:[#allocation2 + $0x18] sm:$0xff]
        %v327 = vpack.c.bf16 %v325, %v323
        %v328 = vpack.c.bf16 %v326, %v324
        %v329 = vld [vmem:[#allocation7] sm:$0xff]
        %v330 = vld [vmem:[#allocation7 + $0x8] sm:$0xff]
        %v331 = vld [vmem:[#allocation7 + $0x10] sm:$0xff]
        %v332 = vld [vmem:[#allocation7 + $0x18] sm:$0xff]
        %v333 = vld [vmem:[#allocation7 + $0x20] sm:$0xff]
        %v334 = vld [vmem:[#allocation7 + $0x28] sm:$0xff]
        %v335 = vld [vmem:[#allocation7 + $0x30] sm:$0xff]
        %v336 = vld [vmem:[#allocation7 + $0x38] sm:$0xff]
        %v337 = vld [vmem:[#allocation7 + $0x40] sm:$0xff]
        %v338 = vld [vmem:[#allocation7 + $0x48] sm:$0xff]
        %v339 = vld [vmem:[#allocation7 + $0x50] sm:$0xff]
        %v340 = vld [vmem:[#allocation7 + $0x58] sm:$0xff]
        %v341 = vld [vmem:[#allocation7 + $0x60] sm:$0xff]
        %v342 = vld [vmem:[#allocation7 + $0x68] sm:$0xff]
        %v343 = vld [vmem:[#allocation7 + $0x70] sm:$0xff]
        %v344 = vld [vmem:[#allocation7 + $0x78] sm:$0xff]
        %v345 = vld [vmem:[#allocation7 + $0x80] sm:$0xff]
        %v346 = vld [vmem:[#allocation7 + $0x88] sm:$0xff]
        %v347 = vld [vmem:[#allocation2] sm:$0xfe]
        %v348 = vld [vmem:[#allocation2 + $0x8] sm:$0xfe]
        %v349 = vld [vmem:[#allocation2 + $0x20] sm:$0x1]
        %v350 = vld [vmem:[#allocation2 + $0x28] sm:$0x1]
        %v351 = vpack.c.bf16 %v325, %v347
        %v352 = vpack.c.bf16 %v326, %v348
        %v353 = vpack.c.bf16 %v349, %v349
        %v354 = vpack.c.bf16 %v350, %v350
        %s355 = scalar_lea.vmem [#allocation7], 144
        %v356 = vld [vmem:[%s355] sm:$0xff]
        %v357 = vld [vmem:[%s355 + $0x8] sm:$0xff]
        %v358 = vld [vmem:[%s355 + $0x10] sm:$0xff]
        %v359 = vld [vmem:[%s355 + $0x18] sm:$0xff]
        %v360 = vld [vmem:[%s355 + $0x20] sm:$0xff]
        %v361 = vld [vmem:[%s355 + $0x28] sm:$0xff]
        %v362 = vld [vmem:[%s355 + $0x30] sm:$0xff]
        %v363 = vld [vmem:[%s355 + $0x38] sm:$0xff]
        %v364 = vld [vmem:[%s355 + $0x40] sm:$0xff]
        %v365 = vld [vmem:[%s355 + $0x48] sm:$0xff]
        %v366 = vld [vmem:[%s355 + $0x50] sm:$0xff]
        %v367 = vld [vmem:[%s355 + $0x58] sm:$0xff]
        %v368 = vld [vmem:[%s355 + $0x60] sm:$0xff]
        %v369 = vld [vmem:[%s355 + $0x68] sm:$0xff]
        %v370 = vld [vmem:[%s355 + $0x70] sm:$0xff]
        %v371 = vld [vmem:[%s355 + $0x78] sm:$0xff]
        %v372 = vld [vmem:[%s355 + $0x80] sm:$0xff]
        %v373 = vld [vmem:[%s355 + $0x88] sm:$0xff]
        %vm374 = vsmask.f32 7424
        %v376 = vshrl.u32 %v351, 16
        %v378 = vshll.u32 %v351, 16
        %v380 = vrot.slane %v378, 1
        %v381 = vor.u32 %v376, %v380
        %v383 = vshll.u32 %v353, 16
        %v385 = vrot.slane %v383, 1
        %v386 = vsel %vm374, %v381, %v385
        %v388 = vshrl.u32 %v352, 16
        %v390 = vshll.u32 %v352, 16
        %v392 = vrot.slane %v390, 1
        %v393 = vor.u32 %v388, %v392
        %v395 = vshll.u32 %v354, 16
        %v397 = vrot.slane %v395, 1
        %v398 = vsel %vm374, %v393, %v397
        %v418 = vunpack.c.l.b16 %v356
        %v419 = vunpack.c.h.b16 %v356
        %v420 = vunpack.c.l.b16 %v357
        %v421 = vunpack.c.h.b16 %v357
        %v422 = vunpack.c.l.b16 %v358
        %v423 = vunpack.c.h.b16 %v358
        %v424 = vunpack.c.l.b16 %v359
        %v425 = vunpack.c.h.b16 %v359
        %v426 = vunpack.c.l.b16 %v360
        %v427 = vunpack.c.h.b16 %v360
        %v428 = vunpack.c.l.b16 %v361
        %v429 = vunpack.c.h.b16 %v361
        %v430 = vunpack.c.l.b16 %v362
        %v431 = vunpack.c.h.b16 %v362
        %v432 = vunpack.c.l.b16 %v363
        %v433 = vunpack.c.h.b16 %v363
        %v434 = vunpack.c.l.b16 %v364
        %v435 = vunpack.c.h.b16 %v364
        %v436 = vunpack.c.l.b16 %v365
        %v437 = vunpack.c.h.b16 %v365
        %v438 = vunpack.c.l.b16 %v366
        %v439 = vunpack.c.h.b16 %v366
        %v440 = vunpack.c.l.b16 %v367
        %v441 = vunpack.c.h.b16 %v367
        %v442 = vunpack.c.l.b16 %v368
        %v443 = vunpack.c.h.b16 %v368
        %v444 = vunpack.c.l.b16 %v369
        %v445 = vunpack.c.h.b16 %v369
        %v446 = vunpack.c.l.b16 %v370
        %v447 = vunpack.c.h.b16 %v370
        %v448 = vunpack.c.l.b16 %v371
        %v449 = vunpack.c.h.b16 %v371
        %v450 = vunpack.c.l.b16 %v372
        %v451 = vunpack.c.h.b16 %v372
        %v452 = vunpack.c.l.b16 %v373
        %v453 = vunpack.c.h.b16 %v373
        %v454 = vpack.c.b16 %v420, %v418
        %v455 = vpack.c.b16 %v421, %v419
        %v456 = vpack.c.b16 %v424, %v422
        %v457 = vpack.c.b16 %v425, %v423
        %v458 = vpack.c.b16 %v428, %v426
        %v459 = vpack.c.b16 %v429, %v427
        %v460 = vpack.c.b16 %v432, %v430
        %v461 = vpack.c.b16 %v433, %v431
        %v462 = vpack.c.b16 %v436, %v434
        %v463 = vpack.c.b16 %v437, %v435
        %v464 = vpack.c.b16 %v440, %v438
        %v465 = vpack.c.b16 %v441, %v439
        %v466 = vpack.c.b16 %v444, %v442
        %v467 = vpack.c.b16 %v445, %v443
        %v468 = vpack.c.b16 %v448, %v446
        %v469 = vpack.c.b16 %v449, %v447
        %v470 = vpack.c.b16 %v452, %v450
        %v471 = vpack.c.b16 %v453, %v451
        %v491 = vsel %vm309, %v398, 0
        %493 = vmatprep.subr.bf16.mxu0 %v469
        %494 = vmatpush1.bf16.msra.mxu0 %v468
        %495 = vmatprep.subr.bf16.mxu0 %v467
        %496 = vmatpush1.bf16.msra.mxu0 %v466
        %497 = vmatprep.subr.bf16.mxu0 %v465
        %498 = vmatpush1.bf16.msra.mxu0 %v464
        %499 = vmatprep.subr.bf16.mxu0 %v463
        %500 = vmatpush1.bf16.msra.mxu0 %v462
        %501 = vmatprep.subr.bf16.mxu0 %v461
        %502 = vmatpush1.bf16.msra.mxu0 %v460
        %503 = vmatprep.subr.bf16.mxu0 %v459
        %504 = vmatpush1.bf16.msra.mxu0 %v458
        %505 = vmatprep.subr.bf16.mxu0 %v457
        %506 = vmatpush1.bf16.msra.mxu0 %v456
        %507 = vmatprep.subr.bf16.mxu0 %v455
        %508 = vmatpush1.bf16.msra.mxu0 %v454
        %509 = vmatprep.subr.bf16.mxu0 0
        %510 = vmatpush2.bf16.msra.mxu0 0
        %511 = vmatprep.subr.bf16.mxu0 0
        %512 = vmatpush2.bf16.msra.mxu0 0
        %513 = vmatprep.subr.bf16.mxu0 0
        %514 = vmatpush2.bf16.msra.mxu0 0
        %515 = vmatprep.subr.bf16.mxu0 0
        %516 = vmatpush2.bf16.msra.mxu0 0
        %517 = vmatprep.subr.bf16.mxu0 0
        %518 = vmatpush2.bf16.msra.mxu0 0
        %519 = vmatprep.subr.bf16.mxu0 0
        %520 = vmatpush2.bf16.msra.mxu0 0
        %521 = vmatprep.subr.bf16.mxu0 0
        %522 = vmatpush2.bf16.msra.mxu0 0
        %523 = vmatprep.subr.bf16.mxu0 %v471
        %524 = vmatpush2.bf16.msra.mxu0 %v470
        %525 = vmatprep.mubr.bf16.mxu0 %v491
        %526 = vmatmul.mubr.bf16.gmra.mxu0 %v386
        %v527 = vpop.f32.mrf.mxu0
        %v528 = vadd.f32 0.0, %v527
        %v529 = vpop.f32.mrf.mxu0
        %v530 = vadd.f32 0.0, %v529
        %v531 = vpop.f32.mrf.mxu0
        %v532 = vadd.f32 0.0, %v531
        %v533 = vpop.f32.mrf.mxu0
        %v534 = vadd.f32 0.0, %v533
        %535 = vdwg.mxu0
        %v554 = vunpack.c.l.b16 %v329
        %v555 = vunpack.c.h.b16 %v329
        %v556 = vunpack.c.l.b16 %v330
        %v557 = vunpack.c.h.b16 %v330
        %v558 = vunpack.c.l.b16 %v331
        %v559 = vunpack.c.h.b16 %v331
        %v560 = vunpack.c.l.b16 %v332
        %v561 = vunpack.c.h.b16 %v332
        %v562 = vunpack.c.l.b16 %v333
        %v563 = vunpack.c.h.b16 %v333
        %v564 = vunpack.c.l.b16 %v334
        %v565 = vunpack.c.h.b16 %v334
        %v566 = vunpack.c.l.b16 %v335
        %v567 = vunpack.c.h.b16 %v335
        %v568 = vunpack.c.l.b16 %v336
        %v569 = vunpack.c.h.b16 %v336
        %v570 = vunpack.c.l.b16 %v337
        %v571 = vunpack.c.h.b16 %v337
        %v572 = vunpack.c.l.b16 %v338
        %v573 = vunpack.c.h.b16 %v338
        %v574 = vunpack.c.l.b16 %v339
        %v575 = vunpack.c.h.b16 %v339
        %v576 = vunpack.c.l.b16 %v340
        %v577 = vunpack.c.h.b16 %v340
        %v578 = vunpack.c.l.b16 %v341
        %v579 = vunpack.c.h.b16 %v341
        %v580 = vunpack.c.l.b16 %v342
        %v581 = vunpack.c.h.b16 %v342
        %v582 = vunpack.c.l.b16 %v343
        %v583 = vunpack.c.h.b16 %v343
        %v584 = vunpack.c.l.b16 %v344
        %v585 = vunpack.c.h.b16 %v344
        %v586 = vunpack.c.l.b16 %v345
        %v587 = vunpack.c.h.b16 %v345
        %v588 = vunpack.c.l.b16 %v346
        %v589 = vunpack.c.h.b16 %v346
        %v590 = vpack.c.b16 %v556, %v554
        %v591 = vpack.c.b16 %v557, %v555
        %v592 = vpack.c.b16 %v560, %v558
        %v593 = vpack.c.b16 %v561, %v559
        %v594 = vpack.c.b16 %v564, %v562
        %v595 = vpack.c.b16 %v565, %v563
        %v596 = vpack.c.b16 %v568, %v566
        %v597 = vpack.c.b16 %v569, %v567
        %v598 = vpack.c.b16 %v572, %v570
        %v599 = vpack.c.b16 %v573, %v571
        %v600 = vpack.c.b16 %v576, %v574
        %v601 = vpack.c.b16 %v577, %v575
        %v602 = vpack.c.b16 %v580, %v578
        %v603 = vpack.c.b16 %v581, %v579
        %v604 = vpack.c.b16 %v584, %v582
        %v605 = vpack.c.b16 %v585, %v583
        %v606 = vpack.c.b16 %v588, %v586
        %v607 = vpack.c.b16 %v589, %v587
        %v627 = vsel %vm309, %v328, 0
        %629 = vmatprep.subr.bf16.mxu0 %v605
        %630 = vmatpush1.bf16.msra.mxu0 %v604
        %631 = vmatprep.subr.bf16.mxu0 %v603
        %632 = vmatpush1.bf16.msra.mxu0 %v602
        %633 = vmatprep.subr.bf16.mxu0 %v601
        %634 = vmatpush1.bf16.msra.mxu0 %v600
        %635 = vmatprep.subr.bf16.mxu0 %v599
        %636 = vmatpush1.bf16.msra.mxu0 %v598
        %637 = vmatprep.subr.bf16.mxu0 %v597
        %638 = vmatpush1.bf16.msra.mxu0 %v596
        %639 = vmatprep.subr.bf16.mxu0 %v595
        %640 = vmatpush1.bf16.msra.mxu0 %v594
        %641 = vmatprep.subr.bf16.mxu0 %v593
        %642 = vmatpush1.bf16.msra.mxu0 %v592
        %643 = vmatprep.subr.bf16.mxu0 %v591
        %644 = vmatpush1.bf16.msra.mxu0 %v590
        %645 = vmatprep.subr.bf16.mxu0 0
        %646 = vmatpush2.bf16.msra.mxu0 0
        %647 = vmatprep.subr.bf16.mxu0 0
        %648 = vmatpush2.bf16.msra.mxu0 0
        %649 = vmatprep.subr.bf16.mxu0 0
        %650 = vmatpush2.bf16.msra.mxu0 0
        %651 = vmatprep.subr.bf16.mxu0 0
        %652 = vmatpush2.bf16.msra.mxu0 0
        %653 = vmatprep.subr.bf16.mxu0 0
        %654 = vmatpush2.bf16.msra.mxu0 0
        %655 = vmatprep.subr.bf16.mxu0 0
        %656 = vmatpush2.bf16.msra.mxu0 0
        %657 = vmatprep.subr.bf16.mxu0 0
        %658 = vmatpush2.bf16.msra.mxu0 0
        %659 = vmatprep.subr.bf16.mxu0 %v607
        %660 = vmatpush2.bf16.msra.mxu0 %v606
        %661 = vmatprep.mubr.bf16.mxu0 %v627
        %662 = vmatmul.mubr.bf16.gmra.mxu0 %v327
        %v663 = vpop.f32.mrf.mxu0
        %v664 = vadd.f32 %v528, %v663
        %v665 = vpop.f32.mrf.mxu0
        %v666 = vadd.f32 %v530, %v665
        %v667 = vpop.f32.mrf.mxu0
        %v668 = vadd.f32 %v532, %v667
        %v669 = vpop.f32.mrf.mxu0
        %v670 = vadd.f32 %v534, %v669
        %671 = vdwg.mxu0
        %v672 = vld [vmem:[#allocation2] sm:$0xfc]
        %v673 = vld [vmem:[#allocation2 + $0x8] sm:$0xfc]
        %v674 = vld [vmem:[#allocation2 + $0x20] sm:$0x3]
        %v675 = vld [vmem:[#allocation2 + $0x28] sm:$0x3]
        %v676 = vpack.c.bf16 %v325, %v672
        %v677 = vpack.c.bf16 %v326, %v673
        %v678 = vpack.c.bf16 %v674, %v674
        %v679 = vpack.c.bf16 %v675, %v675
        %s680 = scalar_lea.vmem [#allocation7], 288
        %v681 = vld [vmem:[%s680] sm:$0xff]
        %v682 = vld [vmem:[%s680 + $0x8] sm:$0xff]
        %v683 = vld [vmem:[%s680 + $0x10] sm:$0xff]
        %v684 = vld [vmem:[%s680 + $0x18] sm:$0xff]
        %v685 = vld [vmem:[%s680 + $0x20] sm:$0xff]
        %v686 = vld [vmem:[%s680 + $0x28] sm:$0xff]
        %v687 = vld [vmem:[%s680 + $0x30] sm:$0xff]
        %v688 = vld [vmem:[%s680 + $0x38] sm:$0xff]
        %v689 = vld [vmem:[%s680 + $0x40] sm:$0xff]
        %v690 = vld [vmem:[%s680 + $0x48] sm:$0xff]
        %v691 = vld [vmem:[%s680 + $0x50] sm:$0xff]
        %v692 = vld [vmem:[%s680 + $0x58] sm:$0xff]
        %v693 = vld [vmem:[%s680 + $0x60] sm:$0xff]
        %v694 = vld [vmem:[%s680 + $0x68] sm:$0xff]
        %v695 = vld [vmem:[%s680 + $0x70] sm:$0xff]
        %v696 = vld [vmem:[%s680 + $0x78] sm:$0xff]
        %v697 = vld [vmem:[%s680 + $0x80] sm:$0xff]
        %v698 = vld [vmem:[%s680 + $0x88] sm:$0xff]
        %vm703 = vcmask 1046528
        %v704 = vrot.slane %v676, 1
        %v705 = vrot.slane %v678, 1
        %v706 = vsel %vm703, %v704, %v705
        %v707 = vrot.slane %v677, 1
        %v708 = vrot.slane %v679, 1
        %v709 = vsel %vm703, %v707, %v708
        %v729 = vunpack.c.l.b16 %v681
        %v730 = vunpack.c.h.b16 %v681
        %v731 = vunpack.c.l.b16 %v682
        %v732 = vunpack.c.h.b16 %v682
        %v733 = vunpack.c.l.b16 %v683
        %v734 = vunpack.c.h.b16 %v683
        %v735 = vunpack.c.l.b16 %v684
        %v736 = vunpack.c.h.b16 %v684
        %v737 = vunpack.c.l.b16 %v685
        %v738 = vunpack.c.h.b16 %v685
        %v739 = vunpack.c.l.b16 %v686
        %v740 = vunpack.c.h.b16 %v686
        %v741 = vunpack.c.l.b16 %v687
        %v742 = vunpack.c.h.b16 %v687
        %v743 = vunpack.c.l.b16 %v688
        %v744 = vunpack.c.h.b16 %v688
        %v745 = vunpack.c.l.b16 %v689
        %v746 = vunpack.c.h.b16 %v689
        %v747 = vunpack.c.l.b16 %v690
        %v748 = vunpack.c.h.b16 %v690
        %v749 = vunpack.c.l.b16 %v691
        %v750 = vunpack.c.h.b16 %v691
        %v751 = vunpack.c.l.b16 %v692
        %v752 = vunpack.c.h.b16 %v692
        %v753 = vunpack.c.l.b16 %v693
        %v754 = vunpack.c.h.b16 %v693
        %v755 = vunpack.c.l.b16 %v694
        %v756 = vunpack.c.h.b16 %v694
        %v757 = vunpack.c.l.b16 %v695
        %v758 = vunpack.c.h.b16 %v695
        %v759 = vunpack.c.l.b16 %v696
        %v760 = vunpack.c.h.b16 %v696
        %v761 = vunpack.c.l.b16 %v697
        %v762 = vunpack.c.h.b16 %v697
        %v763 = vunpack.c.l.b16 %v698
        %v764 = vunpack.c.h.b16 %v698
        %v765 = vpack.c.b16 %v731, %v729
        %v766 = vpack.c.b16 %v732, %v730
        %v767 = vpack.c.b16 %v735, %v733
        %v768 = vpack.c.b16 %v736, %v734
        %v769 = vpack.c.b16 %v739, %v737
        %v770 = vpack.c.b16 %v740, %v738
        %v771 = vpack.c.b16 %v743, %v741
        %v772 = vpack.c.b16 %v744, %v742
        %v773 = vpack.c.b16 %v747, %v745
        %v774 = vpack.c.b16 %v748, %v746
        %v775 = vpack.c.b16 %v751, %v749
        %v776 = vpack.c.b16 %v752, %v750
        %v777 = vpack.c.b16 %v755, %v753
        %v778 = vpack.c.b16 %v756, %v754
        %v779 = vpack.c.b16 %v759, %v757
        %v780 = vpack.c.b16 %v760, %v758
        %v781 = vpack.c.b16 %v763, %v761
        %v782 = vpack.c.b16 %v764, %v762
        %v802 = vsel %vm309, %v709, 0
        %804 = vmatprep.subr.bf16.mxu0 %v780
        %805 = vmatpush1.bf16.msra.mxu0 %v779
        %806 = vmatprep.subr.bf16.mxu0 %v778
        %807 = vmatpush1.bf16.msra.mxu0 %v777
        %808 = vmatprep.subr.bf16.mxu0 %v776
        %809 = vmatpush1.bf16.msra.mxu0 %v775
        %810 = vmatprep.subr.bf16.mxu0 %v774
        %811 = vmatpush1.bf16.msra.mxu0 %v773
        %812 = vmatprep.subr.bf16.mxu0 %v772
        %813 = vmatpush1.bf16.msra.mxu0 %v771
        %814 = vmatprep.subr.bf16.mxu0 %v770
        %815 = vmatpush1.bf16.msra.mxu0 %v769
        %816 = vmatprep.subr.bf16.mxu0 %v768
        %817 = vmatpush1.bf16.msra.mxu0 %v767
        %818 = vmatprep.subr.bf16.mxu0 %v766
        %819 = vmatpush1.bf16.msra.mxu0 %v765
        %820 = vmatprep.subr.bf16.mxu0 0
        %821 = vmatpush2.bf16.msra.mxu0 0
        %822 = vmatprep.subr.bf16.mxu0 0
        %823 = vmatpush2.bf16.msra.mxu0 0
        %824 = vmatprep.subr.bf16.mxu0 0
        %825 = vmatpush2.bf16.msra.mxu0 0
        %826 = vmatprep.subr.bf16.mxu0 0
        %827 = vmatpush2.bf16.msra.mxu0 0
        %828 = vmatprep.subr.bf16.mxu0 0
        %829 = vmatpush2.bf16.msra.mxu0 0
        %830 = vmatprep.subr.bf16.mxu0 0
        %831 = vmatpush2.bf16.msra.mxu0 0
        %832 = vmatprep.subr.bf16.mxu0 0
        %833 = vmatpush2.bf16.msra.mxu0 0
        %834 = vmatprep.subr.bf16.mxu0 %v782
        %835 = vmatpush2.bf16.msra.mxu0 %v781
        %836 = vmatprep.mubr.bf16.mxu0 %v802
        %837 = vmatmul.mubr.bf16.gmra.mxu0 %v706
        %v838 = vpop.f32.mrf.mxu0
        %v839 = vadd.f32 0.0, %v838
        %v840 = vpop.f32.mrf.mxu0
        %v841 = vadd.f32 0.0, %v840
        %v842 = vpop.f32.mrf.mxu0
        %v843 = vadd.f32 0.0, %v842
        %v844 = vpop.f32.mrf.mxu0
        %v845 = vadd.f32 0.0, %v844
        %846 = vdwg.mxu0
        %v847 = vadd.f32 %v664, %v839
        %v848 = vadd.f32 %v666, %v841
        %v849 = vadd.f32 %v668, %v843
        %v850 = vadd.f32 %v670, %v845
        %v851 = vld [vmem:[%s2] sm:$0x3]
        %v853 = vlaneseq
        %v854 = vshrl.u32 %v853, 7
        %v855 = vsub.s32 0, %v854
        %v856 = vrot.slane %v851, %v855
        %v857 = vlaneseq
        %v858 = vshrl.u32 %v857, 7
        %v859 = vsub.s32 1, %v858
        %v860 = vrot.slane %v851, %v859
        %v863 = vadd.f32 %v847, %v856
        %v864 = vadd.f32 %v848, %v860
        %v865 = vadd.f32 %v849, %v856
        %v866 = vadd.f32 %v850, %v860
        %v867 = vmax.f32 %v863, 0.0
        %v868 = vmax.f32 %v864, 0.0
        %v869 = vmax.f32 %v865, 0.0
        %v870 = vmax.f32 %v866, 0.0
        %875 = vrot.lane.b32.xlu0 %v867, 16
        %v876 = vpop.permute.xlu0 %875
        %877 = vrot.lane.b32.xlu0 %v868, 16
        %v878 = vpop.permute.xlu0 %877
        %879 = vrot.lane.b32.xlu0 %v869, 16
        %v880 = vpop.permute.xlu0 %879
        %881 = vrot.lane.b32.xlu0 %v870, 16
        %v882 = vpop.permute.xlu0 %881
        %v883 = vsel %vm309, %v876, %v878
        %v884 = vsel %vm309, %v880, %v882
        %v889 = vsel %vm309, 0.0, %v876
        %v890 = vsel %vm309, 0.0, %v880
        %v891 = vsel %vm309, %v878, 0.0
        %v892 = vsel %vm309, %v882, 0.0
        %v897 = vrot.slane %v889, 7
        %v898 = vrot.slane %v883, 7
        %v899 = vrot.slane %v891, 7
        %v900 = vrot.slane %v890, 7
        %v901 = vsel %vm292, %v897, %v900
        %v902 = vrot.slane %v884, 7
        %v903 = vsel %vm292, %v898, %v902
        %v904 = vrot.slane %v892, 7
        %v905 = vsel %vm292, %v899, %v904
        %915 = vst [vmem:[#allocation3] sm:$0xfe] %v897
        %916 = vst [vmem:[#allocation3 + $0x8] sm:$0xfe] %v898
        %vm917 = vcmask 261121
        %918 = vst.msk [vmem:[#allocation3 + $0x10] sm:$0xfe] %vm917, %v899
        %919 = vst [vmem:[#allocation3 + $0x18] sm:$0xff] %v901
        %920 = vst [vmem:[#allocation3 + $0x20] sm:$0xff] %v903
        %vm921 = vcmask 261120
        %922 = vst.msk [vmem:[#allocation3 + $0x28] sm:$0xff] %vm921, %v905
        %923 = vst [vmem:[#allocation3 + $0x30] sm:$0x1] %v900
        %924 = vst [vmem:[#allocation3 + $0x38] sm:$0x1] %v902
        %vm925 = vcmask 253952
        %926 = vst.msk [vmem:[#allocation3 + $0x40] sm:$0x1] %vm925, %v904
        %vm927 = vcmp.lt.s32.totalorder %v314, 288
        %vm928 = vmand %vm315, %vm927
        %929 = vst.msk [vmem:[#allocation3] ss:$8 sm:$0x7] %vm928, 0.0
        %930 = vst.msk [vmem:[#allocation3] ss:$8 sm:$0x0] %vm928, 0.0
        %s931 = scalar_lea.vmem [#allocation3], 49
        %932 = vst.msk [vmem:[%s931] ss:$8 sm:$0x7] %vm928, 0.0
        %933 = vst.msk [vmem:[%s931] ss:$8 sm:$0x0] %vm928, 0.0
        %v934 = vld [vmem:[#allocation3] sm:$0xff]
        %v935 = vld [vmem:[#allocation3 + $0x8] sm:$0xff]
        %v936 = vld [vmem:[#allocation3 + $0x10] sm:$0xff]
        %v937 = vld [vmem:[#allocation3 + $0x18] sm:$0xff]
        %v938 = vld [vmem:[#allocation3 + $0x20] sm:$0xff]
        %v939 = vld [vmem:[#allocation3 + $0x28] sm:$0xff]
        %v940 = vpack.c.bf16 %v937, %v934
        %v941 = vpack.c.bf16 %v938, %v935
        %v942 = vpack.c.bf16 %v939, %v936
        %v943 = vld [vmem:[#allocation9] sm:$0xf]
        %v944 = vld [vmem:[#allocation9 + $0x4] sm:$0xf]
        %v945 = vld [vmem:[#allocation9 + $0x8] sm:$0xf]
        %v946 = vld [vmem:[#allocation9 + $0xc] sm:$0xf]
        %v947 = vld [vmem:[#allocation9 + $0x10] sm:$0xf]
        %v948 = vld [vmem:[#allocation9 + $0x14] sm:$0xf]
        %v949 = vld [vmem:[#allocation9 + $0x18] sm:$0xf]
        %v950 = vld [vmem:[#allocation9 + $0x1c] sm:$0xf]
        %v951 = vld [vmem:[#allocation9 + $0x20] sm:$0xf]
        %v952 = vld [vmem:[#allocation9 + $0x24] sm:$0xf]
        %v953 = vld [vmem:[#allocation9 + $0x28] sm:$0xf]
        %v954 = vld [vmem:[#allocation9 + $0x2c] sm:$0xf]
        %v955 = vld [vmem:[#allocation9 + $0x30] sm:$0xf]
        %v956 = vld [vmem:[#allocation9 + $0x34] sm:$0xf]
        %v957 = vld [vmem:[#allocation9 + $0x38] sm:$0xf]
        %v958 = vld [vmem:[#allocation9 + $0x3c] sm:$0xf]
        %v959 = vld [vmem:[#allocation9 + $0x40] sm:$0xf]
        %v960 = vld [vmem:[#allocation9 + $0x44] sm:$0xf]
        %v961 = vld [vmem:[#allocation9 + $0x48] sm:$0xf]
        %v962 = vld [vmem:[#allocation9 + $0x4c] sm:$0xf]
        %v963 = vld [vmem:[#allocation9 + $0x50] sm:$0xf]
        %v964 = vld [vmem:[#allocation9 + $0x54] sm:$0xf]
        %v965 = vld [vmem:[#allocation9 + $0x58] sm:$0xf]
        %v966 = vld [vmem:[#allocation9 + $0x5c] sm:$0xf]
        %v967 = vld [vmem:[#allocation9 + $0x60] sm:$0xf]
        %v968 = vld [vmem:[#allocation9 + $0x64] sm:$0xf]
        %v969 = vld [vmem:[#allocation9 + $0x68] sm:$0xf]
        %v970 = vld [vmem:[#allocation9 + $0x6c] sm:$0xf]
        %v971 = vld [vmem:[#allocation9 + $0x70] sm:$0xf]
        %v972 = vld [vmem:[#allocation9 + $0x74] sm:$0xf]
        %v973 = vld [vmem:[#allocation9 + $0x78] sm:$0xf]
        %v974 = vld [vmem:[#allocation9 + $0x7c] sm:$0xf]
        %v975 = vld [vmem:[#allocation9 + $0x80] sm:$0xf]
        %v976 = vld [vmem:[#allocation9 + $0x84] sm:$0xf]
        %v977 = vld [vmem:[#allocation9 + $0x88] sm:$0xf]
        %v978 = vld [vmem:[#allocation9 + $0x8c] sm:$0xf]
        %v979 = vld [vmem:[#allocation3] sm:$0xfe]
        %v980 = vld [vmem:[#allocation3 + $0x8] sm:$0xfe]
        %v981 = vld [vmem:[#allocation3 + $0x10] sm:$0xfe]
        %v982 = vld [vmem:[#allocation3 + $0x30] sm:$0x1]
        %v983 = vld [vmem:[#allocation3 + $0x38] sm:$0x1]
        %v984 = vld [vmem:[#allocation3 + $0x40] sm:$0x1]
        %v985 = vpack.c.bf16 %v937, %v979
        %v986 = vpack.c.bf16 %v938, %v980
        %v987 = vpack.c.bf16 %v939, %v981
        %v988 = vpack.c.bf16 %v982, %v982
        %v989 = vpack.c.bf16 %v983, %v983
        %v990 = vpack.c.bf16 %v984, %v984
        %s991 = scalar_lea.vmem [#allocation9], 144
        %v992 = vld [vmem:[%s991] sm:$0xf]
        %v993 = vld [vmem:[%s991 + $0x4] sm:$0xf]
        %v994 = vld [vmem:[%s991 + $0x8] sm:$0xf]
        %v995 = vld [vmem:[%s991 + $0xc] sm:$0xf]
        %v996 = vld [vmem:[%s991 + $0x10] sm:$0xf]
        %v997 = vld [vmem:[%s991 + $0x14] sm:$0xf]
        %v998 = vld [vmem:[%s991 + $0x18] sm:$0xf]
        %v999 = vld [vmem:[%s991 + $0x1c] sm:$0xf]
        %v1000 = vld [vmem:[%s991 + $0x20] sm:$0xf]
        %v1001 = vld [vmem:[%s991 + $0x24] sm:$0xf]
        %v1002 = vld [vmem:[%s991 + $0x28] sm:$0xf]
        %v1003 = vld [vmem:[%s991 + $0x2c] sm:$0xf]
        %v1004 = vld [vmem:[%s991 + $0x30] sm:$0xf]
        %v1005 = vld [vmem:[%s991 + $0x34] sm:$0xf]
        %v1006 = vld [vmem:[%s991 + $0x38] sm:$0xf]
        %v1007 = vld [vmem:[%s991 + $0x3c] sm:$0xf]
        %v1008 = vld [vmem:[%s991 + $0x40] sm:$0xf]
        %v1009 = vld [vmem:[%s991 + $0x44] sm:$0xf]
        %v1010 = vld [vmem:[%s991 + $0x48] sm:$0xf]
        %v1011 = vld [vmem:[%s991 + $0x4c] sm:$0xf]
        %v1012 = vld [vmem:[%s991 + $0x50] sm:$0xf]
        %v1013 = vld [vmem:[%s991 + $0x54] sm:$0xf]
        %v1014 = vld [vmem:[%s991 + $0x58] sm:$0xf]
        %v1015 = vld [vmem:[%s991 + $0x5c] sm:$0xf]
        %v1016 = vld [vmem:[%s991 + $0x60] sm:$0xf]
        %v1017 = vld [vmem:[%s991 + $0x64] sm:$0xf]
        %v1018 = vld [vmem:[%s991 + $0x68] sm:$0xf]
        %v1019 = vld [vmem:[%s991 + $0x6c] sm:$0xf]
        %v1020 = vld [vmem:[%s991 + $0x70] sm:$0xf]
        %v1021 = vld [vmem:[%s991 + $0x74] sm:$0xf]
        %v1022 = vld [vmem:[%s991 + $0x78] sm:$0xf]
        %v1023 = vld [vmem:[%s991 + $0x7c] sm:$0xf]
        %v1024 = vld [vmem:[%s991 + $0x80] sm:$0xf]
        %v1025 = vld [vmem:[%s991 + $0x84] sm:$0xf]
        %v1026 = vld [vmem:[%s991 + $0x88] sm:$0xf]
        %v1027 = vld [vmem:[%s991 + $0x8c] sm:$0xf]
        %v1029 = vshrl.u32 %v985, 16
        %v1031 = vshll.u32 %v985, 16
        %v1033 = vrot.slane %v1031, 1
        %v1034 = vor.u32 %v1029, %v1033
        %v1036 = vshll.u32 %v988, 16
        %v1038 = vrot.slane %v1036, 1
        %v1039 = vsel %vm374, %v1034, %v1038
        %v1041 = vshrl.u32 %v986, 16
        %v1043 = vshll.u32 %v986, 16
        %v1045 = vrot.slane %v1043, 1
        %v1046 = vor.u32 %v1041, %v1045
        %v1048 = vshll.u32 %v989, 16
        %v1050 = vrot.slane %v1048, 1
        %v1051 = vsel %vm374, %v1046, %v1050
        %v1053 = vshrl.u32 %v987, 16
        %v1055 = vshll.u32 %v987, 16
        %v1057 = vrot.slane %v1055, 1
        %v1058 = vor.u32 %v1053, %v1057
        %v1060 = vshll.u32 %v990, 16
        %v1062 = vrot.slane %v1060, 1
        %v1063 = vsel %vm374, %v1058, %v1062
        %v1102 = vunpack.c.l.b16 %v992
        %v1103 = vunpack.c.l.b16 %v993
        %v1104 = vunpack.c.l.b16 %v994
        %v1105 = vunpack.c.l.b16 %v995
        %v1106 = vunpack.c.l.b16 %v996
        %v1107 = vunpack.c.l.b16 %v997
        %v1108 = vunpack.c.l.b16 %v998
        %v1109 = vunpack.c.l.b16 %v999
        %v1110 = vunpack.c.l.b16 %v1000
        %v1111 = vunpack.c.l.b16 %v1001
        %v1112 = vunpack.c.l.b16 %v1002
        %v1113 = vunpack.c.l.b16 %v1003
        %v1114 = vunpack.c.l.b16 %v1004
        %v1115 = vunpack.c.l.b16 %v1005
        %v1116 = vunpack.c.l.b16 %v1006
        %v1117 = vunpack.c.l.b16 %v1007
        %v1118 = vunpack.c.l.b16 %v1008
        %v1119 = vunpack.c.l.b16 %v1009
        %v1120 = vunpack.c.l.b16 %v1010
        %v1121 = vunpack.c.l.b16 %v1011
        %v1122 = vunpack.c.l.b16 %v1012
        %v1123 = vunpack.c.l.b16 %v1013
        %v1124 = vunpack.c.l.b16 %v1014
        %v1125 = vunpack.c.l.b16 %v1015
        %v1126 = vunpack.c.l.b16 %v1016
        %v1127 = vunpack.c.l.b16 %v1017
        %v1128 = vunpack.c.l.b16 %v1018
        %v1129 = vunpack.c.l.b16 %v1019
        %v1130 = vunpack.c.l.b16 %v1020
        %v1131 = vunpack.c.l.b16 %v1021
        %v1132 = vunpack.c.l.b16 %v1022
        %v1133 = vunpack.c.l.b16 %v1023
        %v1134 = vunpack.c.l.b16 %v1024
        %v1135 = vunpack.c.l.b16 %v1025
        %v1136 = vunpack.c.l.b16 %v1026
        %v1137 = vunpack.c.l.b16 %v1027
        %v1138 = vpack.c.b16 %v1103, %v1102
        %v1139 = vpack.c.b16 %v1105, %v1104
        %v1140 = vpack.c.b16 %v1107, %v1106
        %v1141 = vpack.c.b16 %v1109, %v1108
        %v1142 = vpack.c.b16 %v1111, %v1110
        %v1143 = vpack.c.b16 %v1113, %v1112
        %v1144 = vpack.c.b16 %v1115, %v1114
        %v1145 = vpack.c.b16 %v1117, %v1116
        %v1146 = vpack.c.b16 %v1119, %v1118
        %v1147 = vpack.c.b16 %v1121, %v1120
        %v1148 = vpack.c.b16 %v1123, %v1122
        %v1149 = vpack.c.b16 %v1125, %v1124
        %v1150 = vpack.c.b16 %v1127, %v1126
        %v1151 = vpack.c.b16 %v1129, %v1128
        %v1152 = vpack.c.b16 %v1131, %v1130
        %v1153 = vpack.c.b16 %v1133, %v1132
        %v1154 = vpack.c.b16 %v1135, %v1134
        %v1155 = vpack.c.b16 %v1137, %v1136
        %v1175 = vsel %vm921, %v1063, 0
        %1177 = vmatprep.subr.bf16.mxu0 0
        %1178 = vmatpush1.bf16.msra.mxu0 %v1145
        %1179 = vmatprep.subr.bf16.mxu0 0
        %1180 = vmatpush1.bf16.msra.mxu0 %v1144
        %1181 = vmatprep.subr.bf16.mxu0 0
        %1182 = vmatpush1.bf16.msra.mxu0 %v1143
        %1183 = vmatprep.subr.bf16.mxu0 0
        %1184 = vmatpush1.bf16.msra.mxu0 %v1142
        %1185 = vmatprep.subr.bf16.mxu0 0
        %1186 = vmatpush1.bf16.msra.mxu0 %v1141
        %1187 = vmatprep.subr.bf16.mxu0 0
        %1188 = vmatpush1.bf16.msra.mxu0 %v1140
        %1189 = vmatprep.subr.bf16.mxu0 0
        %1190 = vmatpush1.bf16.msra.mxu0 %v1139
        %1191 = vmatprep.subr.bf16.mxu0 0
        %1192 = vmatpush1.bf16.msra.mxu0 %v1138
        %1193 = vmatprep.subr.bf16.mxu0 0
        %1194 = vmatpush2.bf16.msra.mxu0 %v1153
        %1195 = vmatprep.subr.bf16.mxu0 0
        %1196 = vmatpush2.bf16.msra.mxu0 %v1152
        %1197 = vmatprep.subr.bf16.mxu0 0
        %1198 = vmatpush2.bf16.msra.mxu0 %v1151
        %1199 = vmatprep.subr.bf16.mxu0 0
        %1200 = vmatpush2.bf16.msra.mxu0 %v1150
        %1201 = vmatprep.subr.bf16.mxu0 0
        %1202 = vmatpush2.bf16.msra.mxu0 %v1149
        %1203 = vmatprep.subr.bf16.mxu0 0
        %1204 = vmatpush2.bf16.msra.mxu0 %v1148
        %1205 = vmatprep.subr.bf16.mxu0 0
        %1206 = vmatpush2.bf16.msra.mxu0 %v1147
        %1207 = vmatprep.subr.bf16.mxu0 0
        %1208 = vmatpush2.bf16.msra.mxu0 %v1146
        %1209 = vmatprep.mubr.bf16.mxu0 %v1051
        %1210 = vmatmul.mubr.bf16.gmra.mxu0 %v1039
        %v1211 = vpop.f32.mrf.mxu0
        %v1212 = vadd.f32 0.0, %v1211
        %v1213 = vpop.f32.mrf.mxu0
        %v1214 = vpop.f32.mrf.mxu0
        %v1215 = vadd.f32 0.0, %v1214
        %v1216 = vpop.f32.mrf.mxu0
        %1217 = vdwg.mxu0
        %1218 = vmatprep.subr.bf16.mxu0 0
        %1219 = vmatpush1.bf16.msra.mxu0 0
        %1220 = vmatprep.subr.bf16.mxu0 0
        %1221 = vmatpush1.bf16.msra.mxu0 0
        %1222 = vmatprep.subr.bf16.mxu0 0
        %1223 = vmatpush1.bf16.msra.mxu0 0
        %1224 = vmatprep.subr.bf16.mxu0 0
        %1225 = vmatpush1.bf16.msra.mxu0 0
        %1226 = vmatprep.subr.bf16.mxu0 0
        %1227 = vmatpush1.bf16.msra.mxu0 0
        %1228 = vmatprep.subr.bf16.mxu0 0
        %1229 = vmatpush1.bf16.msra.mxu0 0
        %1230 = vmatprep.subr.bf16.mxu0 0
        %1231 = vmatpush1.bf16.msra.mxu0 %v1155
        %1232 = vmatprep.subr.bf16.mxu0 0
        %1233 = vmatpush1.bf16.msra.mxu0 %v1154
        %1234 = vmatprep.subr.bf16.mxu0 0
        %1235 = vmatpush2.bf16.msra.mxu0 0
        %1236 = vmatprep.subr.bf16.mxu0 0
        %1237 = vmatpush2.bf16.msra.mxu0 0
        %1238 = vmatprep.subr.bf16.mxu0 0
        %1239 = vmatpush2.bf16.msra.mxu0 0
        %1240 = vmatprep.subr.bf16.mxu0 0
        %1241 = vmatpush2.bf16.msra.mxu0 0
        %1242 = vmatprep.subr.bf16.mxu0 0
        %1243 = vmatpush2.bf16.msra.mxu0 0
        %1244 = vmatprep.subr.bf16.mxu0 0
        %1245 = vmatpush2.bf16.msra.mxu0 0
        %1246 = vmatprep.subr.bf16.mxu0 0
        %1247 = vmatpush2.bf16.msra.mxu0 0
        %1248 = vmatprep.subr.bf16.mxu0 0
        %1249 = vmatpush2.bf16.msra.mxu0 0
        %1250 = vmatprep.mubr.bf16.mxu0 0
        %1251 = vmatmul.mubr.bf16.gmra.mxu0 %v1175
        %v1252 = vpop.f32.mrf.mxu0
        %v1253 = vadd.f32 %v1212, %v1252
        %v1254 = vpop.f32.mrf.mxu0
        %v1255 = vpop.f32.mrf.mxu0
        %v1256 = vadd.f32 %v1215, %v1255
        %v1257 = vpop.f32.mrf.mxu0
        %1258 = vdwg.mxu0
        %v1295 = vunpack.c.l.b16 %v943
        %v1296 = vunpack.c.l.b16 %v944
        %v1297 = vunpack.c.l.b16 %v945
        %v1298 = vunpack.c.l.b16 %v946
        %v1299 = vunpack.c.l.b16 %v947
        %v1300 = vunpack.c.l.b16 %v948
        %v1301 = vunpack.c.l.b16 %v949
        %v1302 = vunpack.c.l.b16 %v950
        %v1303 = vunpack.c.l.b16 %v951
        %v1304 = vunpack.c.l.b16 %v952
        %v1305 = vunpack.c.l.b16 %v953
        %v1306 = vunpack.c.l.b16 %v954
        %v1307 = vunpack.c.l.b16 %v955
        %v1308 = vunpack.c.l.b16 %v956
        %v1309 = vunpack.c.l.b16 %v957
        %v1310 = vunpack.c.l.b16 %v958
        %v1311 = vunpack.c.l.b16 %v959
        %v1312 = vunpack.c.l.b16 %v960
        %v1313 = vunpack.c.l.b16 %v961
        %v1314 = vunpack.c.l.b16 %v962
        %v1315 = vunpack.c.l.b16 %v963
        %v1316 = vunpack.c.l.b16 %v964
        %v1317 = vunpack.c.l.b16 %v965
        %v1318 = vunpack.c.l.b16 %v966
        %v1319 = vunpack.c.l.b16 %v967
        %v1320 = vunpack.c.l.b16 %v968
        %v1321 = vunpack.c.l.b16 %v969
        %v1322 = vunpack.c.l.b16 %v970
        %v1323 = vunpack.c.l.b16 %v971
        %v1324 = vunpack.c.l.b16 %v972
        %v1325 = vunpack.c.l.b16 %v973
        %v1326 = vunpack.c.l.b16 %v974
        %v1327 = vunpack.c.l.b16 %v975
        %v1328 = vunpack.c.l.b16 %v976
        %v1329 = vunpack.c.l.b16 %v977
        %v1330 = vunpack.c.l.b16 %v978
        %v1331 = vpack.c.b16 %v1296, %v1295
        %v1332 = vpack.c.b16 %v1298, %v1297
        %v1333 = vpack.c.b16 %v1300, %v1299
        %v1334 = vpack.c.b16 %v1302, %v1301
        %v1335 = vpack.c.b16 %v1304, %v1303
        %v1336 = vpack.c.b16 %v1306, %v1305
        %v1337 = vpack.c.b16 %v1308, %v1307
        %v1338 = vpack.c.b16 %v1310, %v1309
        %v1339 = vpack.c.b16 %v1312, %v1311
        %v1340 = vpack.c.b16 %v1314, %v1313
        %v1341 = vpack.c.b16 %v1316, %v1315
        %v1342 = vpack.c.b16 %v1318, %v1317
        %v1343 = vpack.c.b16 %v1320, %v1319
        %v1344 = vpack.c.b16 %v1322, %v1321
        %v1345 = vpack.c.b16 %v1324, %v1323
        %v1346 = vpack.c.b16 %v1326, %v1325
        %v1347 = vpack.c.b16 %v1328, %v1327
        %v1348 = vpack.c.b16 %v1330, %v1329
        %v1368 = vsel %vm921, %v942, 0
        %1370 = vmatprep.subr.bf16.mxu0 0
        %1371 = vmatpush1.bf16.msra.mxu0 %v1338
        %1372 = vmatprep.subr.bf16.mxu0 0
        %1373 = vmatpush1.bf16.msra.mxu0 %v1337
        %1374 = vmatprep.subr.bf16.mxu0 0
        %1375 = vmatpush1.bf16.msra.mxu0 %v1336
        %1376 = vmatprep.subr.bf16.mxu0 0
        %1377 = vmatpush1.bf16.msra.mxu0 %v1335
        %1378 = vmatprep.subr.bf16.mxu0 0
        %1379 = vmatpush1.bf16.msra.mxu0 %v1334
        %1380 = vmatprep.subr.bf16.mxu0 0
        %1381 = vmatpush1.bf16.msra.mxu0 %v1333
        %1382 = vmatprep.subr.bf16.mxu0 0
        %1383 = vmatpush1.bf16.msra.mxu0 %v1332
        %1384 = vmatprep.subr.bf16.mxu0 0
        %1385 = vmatpush1.bf16.msra.mxu0 %v1331
        %1386 = vmatprep.subr.bf16.mxu0 0
        %1387 = vmatpush2.bf16.msra.mxu0 %v1346
        %1388 = vmatprep.subr.bf16.mxu0 0
        %1389 = vmatpush2.bf16.msra.mxu0 %v1345
        %1390 = vmatprep.subr.bf16.mxu0 0
        %1391 = vmatpush2.bf16.msra.mxu0 %v1344
        %1392 = vmatprep.subr.bf16.mxu0 0
        %1393 = vmatpush2.bf16.msra.mxu0 %v1343
        %1394 = vmatprep.subr.bf16.mxu0 0
        %1395 = vmatpush2.bf16.msra.mxu0 %v1342
        %1396 = vmatprep.subr.bf16.mxu0 0
        %1397 = vmatpush2.bf16.msra.mxu0 %v1341
        %1398 = vmatprep.subr.bf16.mxu0 0
        %1399 = vmatpush2.bf16.msra.mxu0 %v1340
        %1400 = vmatprep.subr.bf16.mxu0 0
        %1401 = vmatpush2.bf16.msra.mxu0 %v1339
        %1402 = vmatprep.mubr.bf16.mxu0 %v941
        %1403 = vmatmul.mubr.bf16.gmra.mxu0 %v940
        %v1404 = vpop.f32.mrf.mxu0
        %v1405 = vadd.f32 %v1253, %v1404
        %v1406 = vpop.f32.mrf.mxu0
        %v1407 = vpop.f32.mrf.mxu0
        %v1408 = vadd.f32 %v1256, %v1407
        %v1409 = vpop.f32.mrf.mxu0
        %1410 = vdwg.mxu0
        %1411 = vmatprep.subr.bf16.mxu0 0
        %1412 = vmatpush1.bf16.msra.mxu0 0
        %1413 = vmatprep.subr.bf16.mxu0 0
        %1414 = vmatpush1.bf16.msra.mxu0 0
        %1415 = vmatprep.subr.bf16.mxu0 0
        %1416 = vmatpush1.bf16.msra.mxu0 0
        %1417 = vmatprep.subr.bf16.mxu0 0
        %1418 = vmatpush1.bf16.msra.mxu0 0
        %1419 = vmatprep.subr.bf16.mxu0 0
        %1420 = vmatpush1.bf16.msra.mxu0 0
        %1421 = vmatprep.subr.bf16.mxu0 0
        %1422 = vmatpush1.bf16.msra.mxu0 0
        %1423 = vmatprep.subr.bf16.mxu0 0
        %1424 = vmatpush1.bf16.msra.mxu0 %v1348
        %1425 = vmatprep.subr.bf16.mxu0 0
        %1426 = vmatpush1.bf16.msra.mxu0 %v1347
        %1427 = vmatprep.subr.bf16.mxu0 0
        %1428 = vmatpush2.bf16.msra.mxu0 0
        %1429 = vmatprep.subr.bf16.mxu0 0
        %1430 = vmatpush2.bf16.msra.mxu0 0
        %1431 = vmatprep.subr.bf16.mxu0 0
        %1432 = vmatpush2.bf16.msra.mxu0 0
        %1433 = vmatprep.subr.bf16.mxu0 0
        %1434 = vmatpush2.bf16.msra.mxu0 0
        %1435 = vmatprep.subr.bf16.mxu0 0
        %1436 = vmatpush2.bf16.msra.mxu0 0
        %1437 = vmatprep.subr.bf16.mxu0 0
        %1438 = vmatpush2.bf16.msra.mxu0 0
        %1439 = vmatprep.subr.bf16.mxu0 0
        %1440 = vmatpush2.bf16.msra.mxu0 0
        %1441 = vmatprep.subr.bf16.mxu0 0
        %1442 = vmatpush2.bf16.msra.mxu0 0
        %1443 = vmatprep.mubr.bf16.mxu0 0
        %1444 = vmatmul.mubr.bf16.gmra.mxu0 %v1368
        %v1445 = vpop.f32.mrf.mxu0
        %v1446 = vadd.f32 %v1405, %v1445
        %v1447 = vpop.f32.mrf.mxu0
        %v1448 = vpop.f32.mrf.mxu0
        %v1449 = vadd.f32 %v1408, %v1448
        %v1450 = vpop.f32.mrf.mxu0
        %1451 = vdwg.mxu0
        %v1452 = vld [vmem:[#allocation3] sm:$0xfc]
        %v1453 = vld [vmem:[#allocation3 + $0x8] sm:$0xfc]
        %v1454 = vld [vmem:[#allocation3 + $0x10] sm:$0xfc]
        %v1455 = vld [vmem:[#allocation3 + $0x30] sm:$0x3]
        %v1456 = vld [vmem:[#allocation3 + $0x38] sm:$0x3]
        %v1457 = vld [vmem:[#allocation3 + $0x40] sm:$0x3]
        %v1458 = vpack.c.bf16 %v937, %v1452
        %v1459 = vpack.c.bf16 %v938, %v1453
        %v1460 = vpack.c.bf16 %v939, %v1454
        %v1461 = vpack.c.bf16 %v1455, %v1455
        %v1462 = vpack.c.bf16 %v1456, %v1456
        %v1463 = vpack.c.bf16 %v1457, %v1457
        %s1464 = scalar_lea.vmem [#allocation9], 288
        %v1465 = vld [vmem:[%s1464] sm:$0xf]
        %v1466 = vld [vmem:[%s1464 + $0x4] sm:$0xf]
        %v1467 = vld [vmem:[%s1464 + $0x8] sm:$0xf]
        %v1468 = vld [vmem:[%s1464 + $0xc] sm:$0xf]
        %v1469 = vld [vmem:[%s1464 + $0x10] sm:$0xf]
        %v1470 = vld [vmem:[%s1464 + $0x14] sm:$0xf]
        %v1471 = vld [vmem:[%s1464 + $0x18] sm:$0xf]
        %v1472 = vld [vmem:[%s1464 + $0x1c] sm:$0xf]
        %v1473 = vld [vmem:[%s1464 + $0x20] sm:$0xf]
        %v1474 = vld [vmem:[%s1464 + $0x24] sm:$0xf]
        %v1475 = vld [vmem:[%s1464 + $0x28] sm:$0xf]
        %v1476 = vld [vmem:[%s1464 + $0x2c] sm:$0xf]
        %v1477 = vld [vmem:[%s1464 + $0x30] sm:$0xf]
        %v1478 = vld [vmem:[%s1464 + $0x34] sm:$0xf]
        %v1479 = vld [vmem:[%s1464 + $0x38] sm:$0xf]
        %v1480 = vld [vmem:[%s1464 + $0x3c] sm:$0xf]
        %v1481 = vld [vmem:[%s1464 + $0x40] sm:$0xf]
        %v1482 = vld [vmem:[%s1464 + $0x44] sm:$0xf]
        %v1483 = vld [vmem:[%s1464 + $0x48] sm:$0xf]
        %v1484 = vld [vmem:[%s1464 + $0x4c] sm:$0xf]
        %v1485 = vld [vmem:[%s1464 + $0x50] sm:$0xf]
        %v1486 = vld [vmem:[%s1464 + $0x54] sm:$0xf]
        %v1487 = vld [vmem:[%s1464 + $0x58] sm:$0xf]
        %v1488 = vld [vmem:[%s1464 + $0x5c] sm:$0xf]
        %v1489 = vld [vmem:[%s1464 + $0x60] sm:$0xf]
        %v1490 = vld [vmem:[%s1464 + $0x64] sm:$0xf]
        %v1491 = vld [vmem:[%s1464 + $0x68] sm:$0xf]
        %v1492 = vld [vmem:[%s1464 + $0x6c] sm:$0xf]
        %v1493 = vld [vmem:[%s1464 + $0x70] sm:$0xf]
        %v1494 = vld [vmem:[%s1464 + $0x74] sm:$0xf]
        %v1495 = vld [vmem:[%s1464 + $0x78] sm:$0xf]
        %v1496 = vld [vmem:[%s1464 + $0x7c] sm:$0xf]
        %v1497 = vld [vmem:[%s1464 + $0x80] sm:$0xf]
        %v1498 = vld [vmem:[%s1464 + $0x84] sm:$0xf]
        %v1499 = vld [vmem:[%s1464 + $0x88] sm:$0xf]
        %v1500 = vld [vmem:[%s1464 + $0x8c] sm:$0xf]
        %v1507 = vrot.slane %v1458, 1
        %v1508 = vrot.slane %v1461, 1
        %v1509 = vsel %vm703, %v1507, %v1508
        %v1510 = vrot.slane %v1459, 1
        %v1511 = vrot.slane %v1462, 1
        %v1512 = vsel %vm703, %v1510, %v1511
        %v1513 = vrot.slane %v1460, 1
        %v1514 = vrot.slane %v1463, 1
        %v1515 = vsel %vm703, %v1513, %v1514
        %v1554 = vunpack.c.l.b16 %v1465
        %v1555 = vunpack.c.l.b16 %v1466
        %v1556 = vunpack.c.l.b16 %v1467
        %v1557 = vunpack.c.l.b16 %v1468
        %v1558 = vunpack.c.l.b16 %v1469
        %v1559 = vunpack.c.l.b16 %v1470
        %v1560 = vunpack.c.l.b16 %v1471
        %v1561 = vunpack.c.l.b16 %v1472
        %v1562 = vunpack.c.l.b16 %v1473
        %v1563 = vunpack.c.l.b16 %v1474
        %v1564 = vunpack.c.l.b16 %v1475
        %v1565 = vunpack.c.l.b16 %v1476
        %v1566 = vunpack.c.l.b16 %v1477
        %v1567 = vunpack.c.l.b16 %v1478
        %v1568 = vunpack.c.l.b16 %v1479
        %v1569 = vunpack.c.l.b16 %v1480
        %v1570 = vunpack.c.l.b16 %v1481
        %v1571 = vunpack.c.l.b16 %v1482
        %v1572 = vunpack.c.l.b16 %v1483
        %v1573 = vunpack.c.l.b16 %v1484
        %v1574 = vunpack.c.l.b16 %v1485
        %v1575 = vunpack.c.l.b16 %v1486
        %v1576 = vunpack.c.l.b16 %v1487
        %v1577 = vunpack.c.l.b16 %v1488
        %v1578 = vunpack.c.l.b16 %v1489
        %v1579 = vunpack.c.l.b16 %v1490
        %v1580 = vunpack.c.l.b16 %v1491
        %v1581 = vunpack.c.l.b16 %v1492
        %v1582 = vunpack.c.l.b16 %v1493
        %v1583 = vunpack.c.l.b16 %v1494
        %v1584 = vunpack.c.l.b16 %v1495
        %v1585 = vunpack.c.l.b16 %v1496
        %v1586 = vunpack.c.l.b16 %v1497
        %v1587 = vunpack.c.l.b16 %v1498
        %v1588 = vunpack.c.l.b16 %v1499
        %v1589 = vunpack.c.l.b16 %v1500
        %v1590 = vpack.c.b16 %v1555, %v1554
        %v1591 = vpack.c.b16 %v1557, %v1556
        %v1592 = vpack.c.b16 %v1559, %v1558
        %v1593 = vpack.c.b16 %v1561, %v1560
        %v1594 = vpack.c.b16 %v1563, %v1562
        %v1595 = vpack.c.b16 %v1565, %v1564
        %v1596 = vpack.c.b16 %v1567, %v1566
        %v1597 = vpack.c.b16 %v1569, %v1568
        %v1598 = vpack.c.b16 %v1571, %v1570
        %v1599 = vpack.c.b16 %v1573, %v1572
        %v1600 = vpack.c.b16 %v1575, %v1574
        %v1601 = vpack.c.b16 %v1577, %v1576
        %v1602 = vpack.c.b16 %v1579, %v1578
        %v1603 = vpack.c.b16 %v1581, %v1580
        %v1604 = vpack.c.b16 %v1583, %v1582
        %v1605 = vpack.c.b16 %v1585, %v1584
        %v1606 = vpack.c.b16 %v1587, %v1586
        %v1607 = vpack.c.b16 %v1589, %v1588
        %v1627 = vsel %vm921, %v1515, 0
        %1629 = vmatprep.subr.bf16.mxu0 0
        %1630 = vmatpush1.bf16.msra.mxu0 %v1597
        %1631 = vmatprep.subr.bf16.mxu0 0
        %1632 = vmatpush1.bf16.msra.mxu0 %v1596
        %1633 = vmatprep.subr.bf16.mxu0 0
        %1634 = vmatpush1.bf16.msra.mxu0 %v1595
        %1635 = vmatprep.subr.bf16.mxu0 0
        %1636 = vmatpush1.bf16.msra.mxu0 %v1594
        %1637 = vmatprep.subr.bf16.mxu0 0
        %1638 = vmatpush1.bf16.msra.mxu0 %v1593
        %1639 = vmatprep.subr.bf16.mxu0 0
        %1640 = vmatpush1.bf16.msra.mxu0 %v1592
        %1641 = vmatprep.subr.bf16.mxu0 0
        %1642 = vmatpush1.bf16.msra.mxu0 %v1591
        %1643 = vmatprep.subr.bf16.mxu0 0
        %1644 = vmatpush1.bf16.msra.mxu0 %v1590
        %1645 = vmatprep.subr.bf16.mxu0 0
        %1646 = vmatpush2.bf16.msra.mxu0 %v1605
        %1647 = vmatprep.subr.bf16.mxu0 0
        %1648 = vmatpush2.bf16.msra.mxu0 %v1604
        %1649 = vmatprep.subr.bf16.mxu0 0
        %1650 = vmatpush2.bf16.msra.mxu0 %v1603
        %1651 = vmatprep.subr.bf16.mxu0 0
        %1652 = vmatpush2.bf16.msra.mxu0 %v1602
        %1653 = vmatprep.subr.bf16.mxu0 0
        %1654 = vmatpush2.bf16.msra.mxu0 %v1601
        %1655 = vmatprep.subr.bf16.mxu0 0
        %1656 = vmatpush2.bf16.msra.mxu0 %v1600
        %1657 = vmatprep.subr.bf16.mxu0 0
        %1658 = vmatpush2.bf16.msra.mxu0 %v1599
        %1659 = vmatprep.subr.bf16.mxu0 0
        %1660 = vmatpush2.bf16.msra.mxu0 %v1598
        %1661 = vmatprep.mubr.bf16.mxu0 %v1512
        %1662 = vmatmul.mubr.bf16.gmra.mxu0 %v1509
        %v1663 = vpop.f32.mrf.mxu0
        %v1664 = vadd.f32 0.0, %v1663
        %v1665 = vpop.f32.mrf.mxu0
        %v1666 = vpop.f32.mrf.mxu0
        %v1667 = vadd.f32 0.0, %v1666
        %v1668 = vpop.f32.mrf.mxu0
        %1669 = vdwg.mxu0
        %1670 = vmatprep.subr.bf16.mxu0 0
        %1671 = vmatpush1.bf16.msra.mxu0 0
        %1672 = vmatprep.subr.bf16.mxu0 0
        %1673 = vmatpush1.bf16.msra.mxu0 0
        %1674 = vmatprep.subr.bf16.mxu0 0
        %1675 = vmatpush1.bf16.msra.mxu0 0
        %1676 = vmatprep.subr.bf16.mxu0 0
        %1677 = vmatpush1.bf16.msra.mxu0 0
        %1678 = vmatprep.subr.bf16.mxu0 0
        %1679 = vmatpush1.bf16.msra.mxu0 0
        %1680 = vmatprep.subr.bf16.mxu0 0
        %1681 = vmatpush1.bf16.msra.mxu0 0
        %1682 = vmatprep.subr.bf16.mxu0 0
        %1683 = vmatpush1.bf16.msra.mxu0 %v1607
        %1684 = vmatprep.subr.bf16.mxu0 0
        %1685 = vmatpush1.bf16.msra.mxu0 %v1606
        %1686 = vmatprep.subr.bf16.mxu0 0
        %1687 = vmatpush2.bf16.msra.mxu0 0
        %1688 = vmatprep.subr.bf16.mxu0 0
        %1689 = vmatpush2.bf16.msra.mxu0 0
        %1690 = vmatprep.subr.bf16.mxu0 0
        %1691 = vmatpush2.bf16.msra.mxu0 0
        %1692 = vmatprep.subr.bf16.mxu0 0
        %1693 = vmatpush2.bf16.msra.mxu0 0
        %1694 = vmatprep.subr.bf16.mxu0 0
        %1695 = vmatpush2.bf16.msra.mxu0 0
        %1696 = vmatprep.subr.bf16.mxu0 0
        %1697 = vmatpush2.bf16.msra.mxu0 0
        %1698 = vmatprep.subr.bf16.mxu0 0
        %1699 = vmatpush2.bf16.msra.mxu0 0
        %1700 = vmatprep.subr.bf16.mxu0 0
        %1701 = vmatpush2.bf16.msra.mxu0 0
        %1702 = vmatprep.mubr.bf16.mxu0 0
        %1703 = vmatmul.mubr.bf16.gmra.mxu0 %v1627
        %v1704 = vpop.f32.mrf.mxu0
        %v1705 = vadd.f32 %v1664, %v1704
        %v1706 = vpop.f32.mrf.mxu0
        %v1707 = vpop.f32.mrf.mxu0
        %v1708 = vadd.f32 %v1667, %v1707
        %v1709 = vpop.f32.mrf.mxu0
        %1710 = vdwg.mxu0
        %v1711 = vadd.f32 %v1446, %v1705
        %v1712 = vadd.f32 %v1449, %v1708
        %v1713 = vld [vmem:[%s4] sm:$0x1]
        %v1715 = vlaneseq
        %v1716 = vshrl.u32 %v1715, 7
        %v1717 = vsub.s32 0, %v1716
        %v1718 = vrot.slane %v1713, %v1717
        %v1720 = vadd.f32 %v1711, %v1718
        %v1721 = vadd.f32 %v1712, %v1718
        %v1722 = vadd.f32 %v1720, %v273
        %v1723 = vadd.f32 %v1721, %v274
        %v1724 = vmax.f32 %v1722, 0.0
        %v1725 = vmax.f32 %v1723, 0.0
        %1726 = vst [vmem:[%s271] sm:$0xff] %v1724
        %1727 = vst [vmem:[%s271 + $0x8] sm:$0xff] %v1725
        %s1728 = sand.u32 %s141, 1
        %s1729 = scalar_lea.sflag [#allocation6], %s1728
        %s1730 = sand.u32 %s141, 1
        %s1731 = smul.addr %s1730, 16
        %s1732 = scalar_lea.vmem [#allocation10], %s1731
        // Predicated region
        $region53: #{tpu_custom_call.1} parent=39 // pred_check
          %p1733 = pneg %p151
        $region54: #{tpu_custom_call.1} parent=39 // pred_check_branch
          %1735 = sbr.rel (%p1733) target = $region56
        $region55: #{tpu_custom_call.1} parent=39 // pred_region
          %s1737 = ssub.s32 256, 256
          %1738 = vsyncadd %s1729, %s1737
          %s1739 = smul.addr %s23, 2
          %s1740 = smul.addr %s1739, 128
          %s1741 = scalar_lea.hbm %s5, %s1740
          %s1742 = sshll.u32 %s1732, 4
          %s1743 = int_to_ptr.vmem [resolvable:$true] %s1742
          %1748 = dma.vmem_to_hbm [thread:$0]  %s1743, 256, %s1741, %s1729, 128, 128, 8
        $region56: #{tpu_custom_call.1} parent=39 // pred_fallthru
          _
      $region40: #{tpu_custom_call.1} parent=5 // pred_fallthru
        _
      %p1749 = scmp.le.s32.totalorder 2, %s18
      // Predicated region
      $region57: #{tpu_custom_call.1} parent=5 // pred_check
        %p1750 = pneg %p1749
      $region58: #{tpu_custom_call.1} parent=5 // pred_check_branch
        %1752 = sbr.rel (%p1750) target = $region60
      $region59: #{tpu_custom_call.1} parent=5 // pred_region
        %s1753 = ssub.s32 %s18, 2
        // Predicated region
        $region61: #{tpu_custom_call.1} parent=59 // pred_check
          %p1754 = pneg %p157
        $region62: #{tpu_custom_call.1} parent=59 // pred_check_branch
          %1756 = sbr.rel (%p1754) target = $region64
        $region63: #{tpu_custom_call.1} parent=59 // pred_region
          %s1757 = sand.u32 %s142, 1
          %s1758 = scalar_lea.sflag [#allocation6], %s1757
          %s1759 = sand.u32 %s142, 1
          %s1760 = smul.addr %s1759, 16
          %s1761 = scalar_lea.vmem [#allocation10], %s1760
          %1762 = dma.done %s1758, 256
        $region64: #{tpu_custom_call.1} parent=59 // pred_fallthru
          _
      $region60: #{tpu_custom_call.1} parent=5 // pred_fallthru
        _
    $region6: #{tpu_custom_call.1} parent=1 // loop_footer
      %s22 = sadd.s32 1, %s18
    $region7: #{tpu_custom_call.1} parent=1 // loop_footer_branch
      %17 = sbr.rel target = $region3
    $region8: #{tpu_custom_call.1} parent=1 // loop_exit
      _
    %1763 = vsyncpa [#allocation5], 1
    %s1764 = scalar_lea.sflag [#allocation5], 1
    %1765 = vsyncpa %s1764, 1
    %1766 = vsyncpa [#allocation8], 1
    %1767 = vsyncpa [#allocation6], 1
    %s1768 = scalar_lea.sflag [#allocation6], 1
    %1769 = vsyncpa %s1768, 1

</llo_original>
